<compile_context>
chip_gen: v7x
topology: tpu7x:2x2x1
jax: 0.10.0
libtpu: 0.0.40
codegen_flags: <defaults>
</compile_context>

<pallas_src>
import jax
import jax.numpy as jnp
from jax import lax
from jax.experimental import pallas as pl
from jax.experimental.pallas import tpu as pltpu

EPS = 1e-5


# ---------------------------------------------------------------------------
# Fused kernel: BN1+ReLU+Conv1x1 -> BN2+ReLU -> Conv3x3('same'), per image
# ---------------------------------------------------------------------------
def make_fused_dense_layer_kernel(H, W, Cin, Cb, Cout):
    PW = (W + 2) * Cb  # lane width of the zero-padded activation rows

    def kernel(xp_ref, s1_ref, b1_ref, w1b_ref, s2_ref, b2_ref, w2b_ref,
               o_ref, pad_ref):
        # xp_ref : (1, H, W*Cin)   width-packed input image
        # s1/b1  : (1, W*Cin)      BN1 scale/shift tiled along W
        # w1b    : (W*Cin, W*Cb)   block-diagonal 1x1-conv weight
        # s2/b2  : (1, W*Cb)       BN2 scale/shift tiled along W
        # w2b    : (3, (W+2)*Cb, W*Cout)  banded 3x3-conv weight (per dy tap)
        # o_ref  : (1, H, W*Cout)  lane-dense output slab
        # pad_ref: (H+2, (W+2)*Cb) VMEM scratch (zero-padded activation)

        # -- zero only the 1-pixel halo (interior is fully overwritten below).
        #    Done unconditionally: scratch is per-core on megacore parts, so a
        #    @pl.when(program_id==0) guard would leave the second core's halo
        #    uninitialised. Cost: 2 rows + 2 thin column strips of VPU stores.
        pad_ref[0:1, :] = jnp.zeros((1, PW), jnp.float32)
        pad_ref[H + 1:H + 2, :] = jnp.zeros((1, PW), jnp.float32)
        pad_ref[:, 0:Cb] = jnp.zeros((H + 2, Cb), jnp.float32)
        pad_ref[:, PW - Cb:PW] = jnp.zeros((H + 2, Cb), jnp.float32)

        # -- stage 1: BN1 + ReLU + 1x1 conv (single block-diagonal matmul) ----
        a1 = jnp.maximum(xp_ref[0] * s1_ref[...] + b1_ref[...], 0.0)  # (H, W*Cin)
        y = jnp.dot(a1, w1b_ref[...],
                    preferred_element_type=jnp.float32)               # (H, W*Cb)

        # -- stage 2: BN2 + ReLU, written into the padded interior ------------
        a2 = jnp.maximum(y * s2_ref[...] + b2_ref[...], 0.0)          # (H, W*Cb)
        pad_ref[1:H + 1, Cb:Cb + W * Cb] = a2

        # -- stage 3: 3x3 'same' conv as 3 wide-K matmuls (one per dy tap) ----
        acc = jnp.zeros((H, W * Cout), jnp.float32)
        for dy in range(3):  # unrolled; static sublane-offset row slices
            acc += jnp.dot(pad_ref[dy:dy + H, :], w2b_ref[dy],
                           preferred_element_type=jnp.float32)
        o_ref[0] = acc.astype(o_ref.dtype)

    return kernel


# ---------------------------------------------------------------------------
# Wrapper (layout plumbing + host-side weight restructuring, all in plain JAX)
# ---------------------------------------------------------------------------
def fold_bn(gamma, beta, mean, var):
    scale = gamma / jnp.sqrt(var + EPS)
    shift = beta - mean * scale
    return scale.astype(jnp.float32), shift.astype(jnp.float32)


def dense_layer_forward(x_nchw, params):
    N, Cin, H, W = x_nchw.shape
    w1 = params["w1"].astype(jnp.float32)          # (Cin, Cb)
    w2 = params["w2"].astype(jnp.float32)          # (3, 3, Cb, Cout)  HWIO
    Cb = w1.shape[1]
    Cout = w2.shape[-1]

    # NCHW -> NHWC -> width-packed (N, H, W*Cin): lane axis packs (W, Cin).
    xp = jnp.transpose(x_nchw, (0, 2, 3, 1)).reshape(N, H, W * Cin)

    s1, b1 = fold_bn(params["g1"], params["b1"], params["m1"], params["v1"])
    s2, b2 = fold_bn(params["g2"], params["b2"], params["m2"], params["v2"])
    s1t = jnp.tile(s1, W)[None, :]   # (1, W*Cin)
    b1t = jnp.tile(b1, W)[None, :]
    s2t = jnp.tile(s2, W)[None, :]   # (1, W*Cb)
    b2t = jnp.tile(b2, W)[None, :]

    # Block-diagonal 1x1-conv weight: w1b[u*Cin+c, v*Cb+k] = w1[c,k] * (u==v).
    w1b = jnp.einsum("uv,ck->ucvk", jnp.eye(W, dtype=jnp.float32), w1)
    w1b = w1b.reshape(W * Cin, W * Cb)

    # Banded 3x3-conv weight per dy tap:
    #   w2b[dy, (w+dx)*Cb + c, w*Cout + o] = w2[dy, dx, c, o]
    j_idx = jnp.arange(W + 2)[:, None]
    w_idx = jnp.arange(W)[None, :]
    sel = jnp.stack(
        [(j_idx == w_idx + dx).astype(jnp.float32) for dx in range(3)], axis=0
    )                                               # (3, W+2, W)
    w2b = jnp.einsum("xjw,yxco->yjcwo", sel, w2)    # (3, W+2, Cb, W, Cout)
    w2b = w2b.reshape(3, (W + 2) * Cb, W * Cout)

    kernel = make_fused_dense_layer_kernel(H, W, Cin, Cb, Cout)
    out_packed = pl.pallas_call(
        kernel,
        out_shape=jax.ShapeDtypeStruct((N, H, W * Cout), jnp.float32),
        grid_spec=pltpu.PrefetchScalarGridSpec(
            num_scalar_prefetch=0,
            grid=(N,),
            in_specs=[
                pl.BlockSpec((1, H, W * Cin), lambda n: (n, 0, 0)),
                pl.BlockSpec((1, W * Cin), lambda n: (0, 0)),
                pl.BlockSpec((1, W * Cin), lambda n: (0, 0)),
                pl.BlockSpec((W * Cin, W * Cb), lambda n: (0, 0)),
                pl.BlockSpec((1, W * Cb), lambda n: (0, 0)),
                pl.BlockSpec((1, W * Cb), lambda n: (0, 0)),
                pl.BlockSpec((3, (W + 2) * Cb, W * Cout), lambda n: (0, 0, 0)),
            ],
            out_specs=pl.BlockSpec((1, H, W * Cout), lambda n: (n, 0, 0)),
            scratch_shapes=[pltpu.VMEM((H + 2, (W + 2) * Cb), jnp.float32)],
        ),
        compiler_params=pltpu.CompilerParams(
            dimension_semantics=("parallel",),
        ),
    )(xp, s1t, b1t, w1b, s2t, b2t, w2b)

    # Unpack lanes and return NCHW (layout plumbing only).
    out = out_packed.reshape(N, H, W, Cout)
    return jnp.transpose(out, (0, 3, 1, 2))


# ---------------------------------------------------------------------------
# Pure-JAX reference for correctness checking
# ---------------------------------------------------------------------------
def dense_layer_reference(x_nchw, params):
    x = jnp.transpose(x_nchw, (0, 2, 3, 1))
    scale1, shift1 = fold_bn(params["g1"], params["b1"], params["m1"], params["v1"])
    scale2, shift2 = fold_bn(params["g2"], params["b2"], params["m2"], params["v2"])
    a1 = jnp.maximum(x * scale1 + shift1, 0.0)
    y = jnp.einsum("nhwc,cb->nhwb", a1, params["w1"])
    a2 = jnp.maximum(y * scale2 + shift2, 0.0)
    out = lax.conv_general_dilated(
        a2, params["w2"], window_strides=(1, 1), padding="SAME",
        dimension_numbers=("NHWC", "HWIO", "NHWC"),
    )
    return jnp.transpose(out, (0, 3, 1, 2))


if __name__ == "__main__":
    # DenseLayer(in_channels=4, out_channels=8, bottleneck_channels_mplr=4)
    N, Cin, H, W = 2, 4, 16, 16
    Cout = 8
    Cb = Cout * 4  # bottleneck channels = 32

    key = jax.random.PRNGKey(0)
    keys = jax.random.split(key, 12)

    params = {
        # BatchNorm2d(Cin): gamma, beta, running_mean, running_var
        "g1": jax.random.uniform(keys[0], (Cin,), minval=0.5, maxval=1.5),
        "b1": jax.random.normal(keys[1], (Cin,)) * 0.1,
        "m1": jax.random.normal(keys[2], (Cin,)) * 0.1,
        "v1": jax.random.uniform(keys[3], (Cin,), minval=0.5, maxval=1.5),
        # Conv2d(Cin -> Cb, k=1, bias=False): stored as (Cin, Cb)
        "w1": jax.random.normal(keys[4], (Cin, Cb)) * 0.2,
        # BatchNorm2d(Cb)
        "g2": jax.random.uniform(keys[5], (Cb,), minval=0.5, maxval=1.5),
        "b2": jax.random.normal(keys[6], (Cb,)) * 0.1,
        "m2": jax.random.normal(keys[7], (Cb,)) * 0.1,
        "v2": jax.random.uniform(keys[8], (Cb,), minval=0.5, maxval=1.5),
        # Conv2d(Cb -> Cout, k=3, padding='same', bias=False): HWIO (3,3,Cb,Cout)
        "w2": jax.random.normal(keys[9], (3, 3, Cb, Cout)) * 0.1,
    }
    params = {k: v.astype(jnp.float32) for k, v in params.items()}

    x = jax.random.normal(keys[10], (N, Cin, H, W), dtype=jnp.float32)

    fwd = jax.jit(dense_layer_forward)
    out = jax.block_until_ready(fwd(x, params))
    ref = jax.block_until_ready(dense_layer_reference(x, params))

    assert out.shape == (N, Cout, H, W), out.shape
    assert jnp.allclose(out, ref, atol=2e-4, rtol=2e-4), (
        "mismatch vs reference, max err "
        f"{float(jnp.max(jnp.abs(out - ref)))}"
    )
    print("KERNEL_OK")
</pallas_src>

<mosaic_0001>
module attributes {stable_mosaic.version = 11 : i64} {
  func.func @kernel(%arg0: i32, %arg1: memref<1x16x64xf32, #tpu.memory_space<vmem>>, %arg2: memref<1x64xf32, #tpu.memory_space<vmem>>, %arg3: memref<1x64xf32, #tpu.memory_space<vmem>>, %arg4: memref<64x512xf32, #tpu.memory_space<vmem>>, %arg5: memref<1x512xf32, #tpu.memory_space<vmem>>, %arg6: memref<1x512xf32, #tpu.memory_space<vmem>>, %arg7: memref<3x576x128xf32, #tpu.memory_space<vmem>>, %arg8: memref<1x16x128xf32, #tpu.memory_space<vmem>>, %arg9: memref<18x576xf32, #tpu.memory_space<vmem>>) attributes {dimension_semantics = [#tpu.dimension_semantics<parallel>], iteration_bounds = array<i64: 2>, scalar_prefetch = 0 : i64, scratch_operands = 1 : i64, tpu.core_type = #tpu.core_type<tc>, window_params = [{transform_indices = @transform_0, window_bounds = array<i64: 1, 16, 64>}, {pipeline_mode = #tpu.pipeline_mode<synchronous>, transform_indices = @transform_1, window_bounds = array<i64: 1, 64>}, {pipeline_mode = #tpu.pipeline_mode<synchronous>, transform_indices = @transform_2, window_bounds = array<i64: 1, 64>}, {pipeline_mode = #tpu.pipeline_mode<synchronous>, transform_indices = @transform_3, window_bounds = array<i64: 64, 512>}, {pipeline_mode = #tpu.pipeline_mode<synchronous>, transform_indices = @transform_4, window_bounds = array<i64: 1, 512>}, {pipeline_mode = #tpu.pipeline_mode<synchronous>, transform_indices = @transform_5, window_bounds = array<i64: 1, 512>}, {pipeline_mode = #tpu.pipeline_mode<synchronous>, transform_indices = @transform_6, window_bounds = array<i64: 3, 576, 128>}, {transform_indices = @transform_7, window_bounds = array<i64: 1, 16, 128>}]} {
    %cst = arith.constant 0.000000e+00 : f32
    %0 = vector.broadcast %cst : f32 to vector<1x576xf32>
    %c0 = arith.constant 0 : index
    %c0_0 = arith.constant 0 : index
    %1 = vector.load %arg9[%c0, %c0_0] : memref<18x576xf32, #tpu.memory_space<vmem>>, vector<1x576xf32>
    tpu.vector_store %arg9[%c0, %c0_0], %0 {strides = array<i32>} : memref<18x576xf32, #tpu.memory_space<vmem>>, vector<1x576xf32>,
    %cst_1 = arith.constant 0.000000e+00 : f32
    %2 = vector.broadcast %cst_1 : f32 to vector<1x576xf32>
    %c17 = arith.constant 17 : index
    %c0_2 = arith.constant 0 : index
    %3 = vector.load %arg9[%c17, %c0_2] : memref<18x576xf32, #tpu.memory_space<vmem>>, vector<1x576xf32>
    tpu.vector_store %arg9[%c17, %c0_2], %2 {strides = array<i32>} : memref<18x576xf32, #tpu.memory_space<vmem>>, vector<1x576xf32>,
    %cst_3 = arith.constant 0.000000e+00 : f32
    %4 = vector.broadcast %cst_3 : f32 to vector<18x32xf32>
    %c0_4 = arith.constant 0 : index
    %c0_5 = arith.constant 0 : index
    %5 = vector.load %arg9[%c0_4, %c0_5] : memref<18x576xf32, #tpu.memory_space<vmem>>, vector<18x32xf32>
    tpu.vector_store %arg9[%c0_4, %c0_5], %4 {strides = array<i32>} : memref<18x576xf32, #tpu.memory_space<vmem>>, vector<18x32xf32>,
    %cst_6 = arith.constant 0.000000e+00 : f32
    %6 = vector.broadcast %cst_6 : f32 to vector<18x32xf32>
    %c0_7 = arith.constant 0 : index
    %c544 = arith.constant 544 : index
    %7 = vector.load %arg9[%c0_7, %c544] : memref<18x576xf32, #tpu.memory_space<vmem>>, vector<18x32xf32>
    tpu.vector_store %arg9[%c0_7, %c544], %6 {strides = array<i32>} : memref<18x576xf32, #tpu.memory_space<vmem>>, vector<18x32xf32>,
    %c0_8 = arith.constant 0 : index
    %c0_9 = arith.constant 0 : index
    %c0_10 = arith.constant 0 : index
    %8 = vector.load %arg1[%c0_8, %c0_9, %c0_10] : memref<1x16x64xf32, #tpu.memory_space<vmem>>, vector<1x16x64xf32>
    %9 = vector.shape_cast %8 : vector<1x16x64xf32> to vector<16x64xf32>
    %c0_11 = arith.constant 0 : index
    %c0_12 = arith.constant 0 : index
    %10 = vector.load %arg2[%c0_11, %c0_12] : memref<1x64xf32, #tpu.memory_space<vmem>>, vector<1x64xf32>
    %11 = vector.broadcast %10 : vector<1x64xf32> to vector<16x64xf32>
    %12 = arith.mulf %9, %11 : vector<16x64xf32>
    %c0_13 = arith.constant 0 : index
    %c0_14 = arith.constant 0 : index
    %13 = vector.load %arg3[%c0_13, %c0_14] : memref<1x64xf32, #tpu.memory_space<vmem>>, vector<1x64xf32>
    %14 = vector.broadcast %13 : vector<1x64xf32> to vector<16x64xf32>
    %15 = arith.addf %12, %14 : vector<16x64xf32>
    %cst_15 = arith.constant 0.000000e+00 : f32
    %16 = vector.broadcast %cst_15 : f32 to vector<16x64xf32>
    %17 = arith.maximumf %15, %16 : vector<16x64xf32>
    %c0_16 = arith.constant 0 : index
    %c0_17 = arith.constant 0 : index
    %18 = vector.load %arg4[%c0_16, %c0_17] : memref<64x512xf32, #tpu.memory_space<vmem>>, vector<64x512xf32>
    %cst_18 = arith.constant dense<0.000000e+00> : vector<16x512xf32>
    %19 = tpu.matmul %17, %18, %cst_18 {dimension_numbers = #tpu.dot_dimension_numbers<[1], [0], [0], [1], [0, 0, 1, 1], [], []>} : vector<16x64xf32>, vector<64x512xf32>, vector<16x512xf32> -> vector<16x512xf32>
    %c0_19 = arith.constant 0 : index
    %c0_20 = arith.constant 0 : index
    %20 = vector.load %arg5[%c0_19, %c0_20] : memref<1x512xf32, #tpu.memory_space<vmem>>, vector<1x512xf32>
    %21 = vector.broadcast %20 : vector<1x512xf32> to vector<16x512xf32>
    %22 = arith.mulf %19, %21 : vector<16x512xf32>
    %c0_21 = arith.constant 0 : index
    %c0_22 = arith.constant 0 : index
    %23 = vector.load %arg6[%c0_21, %c0_22] : memref<1x512xf32, #tpu.memory_space<vmem>>, vector<1x512xf32>
    %24 = vector.broadcast %23 : vector<1x512xf32> to vector<16x512xf32>
    %25 = arith.addf %22, %24 : vector<16x512xf32>
    %cst_23 = arith.constant 0.000000e+00 : f32
    %26 = vector.broadcast %cst_23 : f32 to vector<16x512xf32>
    %27 = arith.maximumf %25, %26 : vector<16x512xf32>
    %c1 = arith.constant 1 : index
    %c32 = arith.constant 32 : index
    %28 = vector.load %arg9[%c1, %c32] : memref<18x576xf32, #tpu.memory_space<vmem>>, vector<16x512xf32>
    tpu.vector_store %arg9[%c1, %c32], %27 {strides = array<i32>} : memref<18x576xf32, #tpu.memory_space<vmem>>, vector<16x512xf32>,
    %cst_24 = arith.constant 0.000000e+00 : f32
    %29 = vector.broadcast %cst_24 : f32 to vector<16x128xf32>
    %c0_25 = arith.constant 0 : index
    %c0_26 = arith.constant 0 : index
    %30 = vector.load %arg9[%c0_25, %c0_26] : memref<18x576xf32, #tpu.memory_space<vmem>>, vector<16x576xf32>
    %c0_27 = arith.constant 0 : index
    %c0_28 = arith.constant 0 : index
    %c0_29 = arith.constant 0 : index
    %31 = vector.load %arg7[%c0_27, %c0_28, %c0_29] : memref<3x576x128xf32, #tpu.memory_space<vmem>>, vector<1x576x128xf32>
    %32 = vector.shape_cast %31 : vector<1x576x128xf32> to vector<576x128xf32>
    %cst_30 = arith.constant dense<0.000000e+00> : vector<16x128xf32>
    %33 = tpu.matmul %30, %32, %cst_30 {dimension_numbers = #tpu.dot_dimension_numbers<[1], [0], [0], [1], [0, 0, 1, 1], [], []>} : vector<16x576xf32>, vector<576x128xf32>, vector<16x128xf32> -> vector<16x128xf32>
    %34 = arith.addf %29, %33 : vector<16x128xf32>
    %c1_31 = arith.constant 1 : index
    %c0_32 = arith.constant 0 : index
    %35 = vector.load %arg9[%c1_31, %c0_32] : memref<18x576xf32, #tpu.memory_space<vmem>>, vector<16x576xf32>
    %c1_33 = arith.constant 1 : index
    %c0_34 = arith.constant 0 : index
    %c0_35 = arith.constant 0 : index
    %36 = vector.load %arg7[%c1_33, %c0_34, %c0_35] : memref<3x576x128xf32, #tpu.memory_space<vmem>>, vector<1x576x128xf32>
    %37 = vector.shape_cast %36 : vector<1x576x128xf32> to vector<576x128xf32>
    %cst_36 = arith.constant dense<0.000000e+00> : vector<16x128xf32>
    %38 = tpu.matmul %35, %37, %cst_36 {dimension_numbers = #tpu.dot_dimension_numbers<[1], [0], [0], [1], [0, 0, 1, 1], [], []>} : vector<16x576xf32>, vector<576x128xf32>, vector<16x128xf32> -> vector<16x128xf32>
    %39 = arith.addf %34, %38 : vector<16x128xf32>
    %c2 = arith.constant 2 : index
    %c0_37 = arith.constant 0 : index
    %40 = vector.load %arg9[%c2, %c0_37] : memref<18x576xf32, #tpu.memory_space<vmem>>, vector<16x576xf32>
    %c2_38 = arith.constant 2 : index
    %c0_39 = arith.constant 0 : index
    %c0_40 = arith.constant 0 : index
    %41 = vector.load %arg7[%c2_38, %c0_39, %c0_40] : memref<3x576x128xf32, #tpu.memory_space<vmem>>, vector<1x576x128xf32>
    %42 = vector.shape_cast %41 : vector<1x576x128xf32> to vector<576x128xf32>
    %cst_41 = arith.constant dense<0.000000e+00> : vector<16x128xf32>
    %43 = tpu.matmul %40, %42, %cst_41 {dimension_numbers = #tpu.dot_dimension_numbers<[1], [0], [0], [1], [0, 0, 1, 1], [], []>} : vector<16x576xf32>, vector<576x128xf32>, vector<16x128xf32> -> vector<16x128xf32>
    %44 = arith.addf %39, %43 : vector<16x128xf32>
    %c0_42 = arith.constant 0 : index
    %c0_43 = arith.constant 0 : index
    %c0_44 = arith.constant 0 : index
    %45 = vector.load %arg8[%c0_42, %c0_43, %c0_44] : memref<1x16x128xf32, #tpu.memory_space<vmem>>, vector<1x16x128xf32>
    %46 = vector.shape_cast %45 : vector<1x16x128xf32> to vector<16x128xf32>
    %47 = vector.shape_cast %44 : vector<16x128xf32> to vector<1x16x128xf32>
    tpu.vector_store %arg8[%c0_42, %c0_43, %c0_44], %47 {strides = array<i32>} : memref<1x16x128xf32, #tpu.memory_space<vmem>>, vector<1x16x128xf32>,
    return
  }
  func.func @transform_0(%arg0: i32) -> (i32, i32, i32) {
    %c0_i32 = arith.constant 0 : i32
    %c0_i32_0 = arith.constant 0 : i32
    %c0_i32_1 = arith.constant 0 : i32
    return %arg0, %c0_i32, %c0_i32_0 : i32, i32, i32
  }
  func.func @transform_1(%arg0: i32) -> (i32, i32) {
    %c0_i32 = arith.constant 0 : i32
    %c0_i32_0 = arith.constant 0 : i32
    %c0_i32_1 = arith.constant 0 : i32
    return %c0_i32, %c0_i32_0 : i32, i32
  }
  func.func @transform_2(%arg0: i32) -> (i32, i32) {
    %c0_i32 = arith.constant 0 : i32
    %c0_i32_0 = arith.constant 0 : i32
    %c0_i32_1 = arith.constant 0 : i32
    return %c0_i32, %c0_i32_0 : i32, i32
  }
  func.func @transform_3(%arg0: i32) -> (i32, i32) {
    %c0_i32 = arith.constant 0 : i32
    %c0_i32_0 = arith.constant 0 : i32
    %c0_i32_1 = arith.constant 0 : i32
    return %c0_i32, %c0_i32_0 : i32, i32
  }
  func.func @transform_4(%arg0: i32) -> (i32, i32) {
    %c0_i32 = arith.constant 0 : i32
    %c0_i32_0 = arith.constant 0 : i32
    %c0_i32_1 = arith.constant 0 : i32
    return %c0_i32, %c0_i32_0 : i32, i32
  }
  func.func @transform_5(%arg0: i32) -> (i32, i32) {
    %c0_i32 = arith.constant 0 : i32
    %c0_i32_0 = arith.constant 0 : i32
    %c0_i32_1 = arith.constant 0 : i32
    return %c0_i32, %c0_i32_0 : i32, i32
  }
  func.func @transform_6(%arg0: i32) -> (i32, i32, i32) {
    %c0_i32 = arith.constant 0 : i32
    %c0_i32_0 = arith.constant 0 : i32
    %c0_i32_1 = arith.constant 0 : i32
    %c0_i32_2 = arith.constant 0 : i32
    return %c0_i32, %c0_i32_0, %c0_i32_1 : i32, i32, i32
  }
  func.func @transform_7(%arg0: i32) -> (i32, i32, i32) {
    %c0_i32 = arith.constant 0 : i32
    %c0_i32_0 = arith.constant 0 : i32
    %c0_i32_1 = arith.constant 0 : i32
    return %arg0, %c0_i32, %c0_i32_0 : i32, i32, i32
  }
}

</mosaic_0001>

<llo_original>
// kernel: tile.33
$region0: #{tile.33}
  #allocation0 [shape = 's32[1]{0}', space=sflag, size = 0x4, scoped, tag = 'scoped memory for tile.33']
  %s0 = inlined_call_operand.vmem [shape: f32[32], index: 0, kind: input, shape index: {}]
  %s1 = inlined_call_operand.vmem [shape: f32[16,32], index: 1, kind: output, shape index: {}]
  // Predicated region
  $region2: #{tile.33} parent=0 // pred_check
    _
  $region3: #{tile.33} parent=0 // pred_check_branch
    %3 = sbr.rel (0) target = $region5
  $region4: #{tile.33} parent=0 // pred_region
    _
  $region5: #{tile.33} parent=0 // pred_fallthru
    _
  %v4 = vld [vmem:[%s0] ss:$0 sm:$0xff]
  %5 = vst [vmem:[%s1] sm:$0xff] %v4
  %s6 = scalar_lea.vmem %s1, 8
  %7 = vst [vmem:[%s6] sm:$0xff] %v4

// kernel: tile.34
$region0: #{tile.34}
  %s0 = inlined_call_operand.vmem [shape: f32[16,32], index: 0, kind: input, shape index: {}]
  %s1 = inlined_call_operand.vmem [shape: f32[1,512], index: 1, kind: output, shape index: {}]
  $region1: #{tile.34} parent=0
    #allocation0 [shape = 'u8[16384]{0}', space=vmem, size = 0x4000, scoped, tag = 'scoped mem for output reshape']
    %v2 = vld [vmem:[%s0] ss:$4 sm:$0xf]
    %vm3 = vcmask 261120
    %4 = vst.msk [vmem:[#allocation0] ss:$8 sm:$0xf] %vm3, %v2
    %s5 = scalar_lea.vmem %s0, 3
    %v6 = vld [vmem:[%s5] ss:$4 sm:$0xf]
    %7 = vrot.lane.b32.xlu0 %v6, 96
    %v8 = vpop.permute.xlu0 %7
    %vm9 = vcmask 1048320
    %10 = vst.msk [vmem:[#allocation0] ss:$8 sm:$0xf] %vm9, %v8
    %s11 = scalar_lea.vmem %s0, 2
    %v12 = vld [vmem:[%s11] ss:$4 sm:$0xf]
    %13 = vrot.lane.b32.xlu0 %v12, 64
    %v14 = vpop.permute.xlu0 %13
    %vm15 = vcmask 785920
    %16 = vst.msk [vmem:[#allocation0] ss:$8 sm:$0xf] %vm15, %v14
    %s17 = scalar_lea.vmem %s0, 1
    %v18 = vld [vmem:[%s17] ss:$4 sm:$0xf]
    %19 = vrot.lane.b32.xlu0 %v18, 32
    %v20 = vpop.permute.xlu0 %19
    %vm21 = vcmask 523520
    %22 = vst.msk [vmem:[#allocation0] ss:$8 sm:$0xf] %vm21, %v20
    %s24 = sshllo.u32 0, 1
    %v26 = vld [vmem:[#allocation0] sm:%s24]
    %s27 = sshllo.u32 0, 1
    %28 = vst [vmem:[%s1] sm:%s27] %v26
    %s29 = scalar_lea.vmem [#allocation0], 8
    %v30 = vld [vmem:[%s29] sm:%s24]
    %s31 = sshllo.u32 0, 1
    %s32 = scalar_lea.vmem %s1, 1
    %33 = vst [vmem:[%s32] sm:%s31] %v30
    %s34 = scalar_lea.vmem [#allocation0], 16
    %v35 = vld [vmem:[%s34] sm:%s24]
    %s36 = sshllo.u32 0, 1
    %s37 = smul.addr 1, 2
    %s38 = scalar_lea.vmem %s1, %s37
    %39 = vst [vmem:[%s38] sm:%s36] %v35
    %s40 = scalar_lea.vmem [#allocation0], 24
    %v41 = vld [vmem:[%s40] sm:%s24]
    %s42 = sshllo.u32 0, 1
    %s43 = smul.addr 1, 3
    %s44 = scalar_lea.vmem %s1, %s43
    %45 = vst [vmem:[%s44] sm:%s42] %v41

// kernel: tile.23
$region0: #{tile.23}
  #allocation0 [shape = 's32[1]{0}', space=sflag, size = 0x4, scoped, tag = 'scoped memory for tile.23']
  %s0 = inlined_call_operand.vmem [shape: f32[4], index: 0, kind: input, shape index: {}]
  %s1 = inlined_call_operand.vmem [shape: f32[16,4], index: 1, kind: output, shape index: {}]
  // Predicated region
  $region2: #{tile.23} parent=0 // pred_check
    _
  $region3: #{tile.23} parent=0 // pred_check_branch
    %3 = sbr.rel (0) target = $region5
  $region4: #{tile.23} parent=0 // pred_region
    _
  $region5: #{tile.23} parent=0 // pred_fallthru
    _
  %v4 = vld [vmem:[%s0] ss:$0 sm:$0xff]
  %5 = vst [vmem:[%s1] sm:$0xff] %v4
  %s6 = scalar_lea.vmem %s1, 8
  %7 = vst [vmem:[%s6] sm:$0xff] %v4

// kernel: tile.24
$region0: #{tile.24}
  %s0 = inlined_call_operand.vmem [shape: f32[16,4], index: 0, kind: input, shape index: {}]
  %s1 = inlined_call_operand.vmem [shape: f32[1,64], index: 1, kind: output, shape index: {}]
  $region1: #{tile.24} parent=0
    #allocation0 [shape = 'u8[4096]{0}', space=vmem, size = 0x1000, scoped, tag = 'scoped mem for output reshape']
    %v2 = vld [vmem:[%s0] sm:$0x1]
    %vm3 = vcmask 31744
    %4 = vst.msk [vmem:[#allocation0] sm:$0x1] %vm3, %v2
    %s5 = scalar_lea.vmem %s0, 15
    %v6 = vld [vmem:[%s5] sm:$0x1]
    %7 = vrot.lane.b32.xlu0 %v6, 60
    %v8 = vpop.permute.xlu0 %7
    %vm9 = vcmask 523744
    %10 = vst.msk [vmem:[#allocation0] sm:$0x1] %vm9, %v8
    %s11 = scalar_lea.vmem %s0, 14
    %v12 = vld [vmem:[%s11] sm:$0x1]
    %13 = vrot.lane.b32.xlu0 %v12, 56
    %v14 = vpop.permute.xlu0 %13
    %vm15 = vcmask 490944
    %16 = vst.msk [vmem:[#allocation0] sm:$0x1] %vm15, %v14
    %s17 = scalar_lea.vmem %s0, 13
    %v18 = vld [vmem:[%s17] sm:$0x1]
    %19 = vrot.lane.b32.xlu0 %v18, 52
    %v20 = vpop.permute.xlu0 %19
    %vm21 = vcmask 458144
    %22 = vst.msk [vmem:[#allocation0] sm:$0x1] %vm21, %v20
    %s23 = scalar_lea.vmem %s0, 12
    %v24 = vld [vmem:[%s23] sm:$0x1]
    %25 = vrot.lane.b32.xlu0 %v24, 48
    %v26 = vpop.permute.xlu0 %25
    %vm27 = vcmask 425344
    %28 = vst.msk [vmem:[#allocation0] sm:$0x1] %vm27, %v26
    %s29 = scalar_lea.vmem %s0, 11
    %v30 = vld [vmem:[%s29] sm:$0x1]
    %31 = vrot.lane.b32.xlu0 %v30, 44
    %v32 = vpop.permute.xlu0 %31
    %vm33 = vcmask 392544
    %34 = vst.msk [vmem:[#allocation0] sm:$0x1] %vm33, %v32
    %s35 = scalar_lea.vmem %s0, 10
    %v36 = vld [vmem:[%s35] sm:$0x1]
    %37 = vrot.lane.b32.xlu0 %v36, 40
    %v38 = vpop.permute.xlu0 %37
    %vm39 = vcmask 359744
    %40 = vst.msk [vmem:[#allocation0] sm:$0x1] %vm39, %v38
    %s41 = scalar_lea.vmem %s0, 9
    %v42 = vld [vmem:[%s41] sm:$0x1]
    %43 = vrot.lane.b32.xlu0 %v42, 36
    %v44 = vpop.permute.xlu0 %43
    %vm45 = vcmask 326944
    %46 = vst.msk [vmem:[#allocation0] sm:$0x1] %vm45, %v44
    %s47 = scalar_lea.vmem %s0, 8
    %v48 = vld [vmem:[%s47] sm:$0x1]
    %49 = vrot.lane.b32.xlu0 %v48, 32
    %v50 = vpop.permute.xlu0 %49
    %vm51 = vcmask 294144
    %52 = vst.msk [vmem:[#allocation0] sm:$0x1] %vm51, %v50
    %s53 = scalar_lea.vmem %s0, 7
    %v54 = vld [vmem:[%s53] sm:$0x1]
    %55 = vrot.lane.b32.xlu0 %v54, 28
    %v56 = vpop.permute.xlu0 %55
    %vm57 = vcmask 261344
    %58 = vst.msk [vmem:[#allocation0] sm:$0x1] %vm57, %v56
    %s59 = scalar_lea.vmem %s0, 6
    %v60 = vld [vmem:[%s59] sm:$0x1]
    %61 = vrot.lane.b32.xlu0 %v60, 24
    %v62 = vpop.permute.xlu0 %61
    %vm63 = vcmask 228544
    %64 = vst.msk [vmem:[#allocation0] sm:$0x1] %vm63, %v62
    %s65 = scalar_lea.vmem %s0, 5
    %v66 = vld [vmem:[%s65] sm:$0x1]
    %67 = vrot.lane.b32.xlu0 %v66, 20
    %v68 = vpop.permute.xlu0 %67
    %vm69 = vcmask 195744
    %70 = vst.msk [vmem:[#allocation0] sm:$0x1] %vm69, %v68
    %s71 = scalar_lea.vmem %s0, 4
    %v72 = vld [vmem:[%s71] sm:$0x1]
    %73 = vrot.lane.b32.xlu0 %v72, 16
    %v74 = vpop.permute.xlu0 %73
    %vm75 = vcmask 162944
    %76 = vst.msk [vmem:[#allocation0] sm:$0x1] %vm75, %v74
    %s77 = scalar_lea.vmem %s0, 3
    %v78 = vld [vmem:[%s77] sm:$0x1]
    %79 = vrot.lane.b32.xlu0 %v78, 12
    %v80 = vpop.permute.xlu0 %79
    %vm81 = vcmask 130144
    %82 = vst.msk [vmem:[#allocation0] sm:$0x1] %vm81, %v80
    %s83 = scalar_lea.vmem %s0, 2
    %v84 = vld [vmem:[%s83] sm:$0x1]
    %85 = vrot.lane.b32.xlu0 %v84, 8
    %v86 = vpop.permute.xlu0 %85
    %vm87 = vcmask 97344
    %88 = vst.msk [vmem:[#allocation0] sm:$0x1] %vm87, %v86
    %s89 = scalar_lea.vmem %s0, 1
    %v90 = vld [vmem:[%s89] sm:$0x1]
    %91 = vrot.lane.b32.xlu0 %v90, 4
    %v92 = vpop.permute.xlu0 %91
    %vm93 = vcmask 64544
    %94 = vst.msk [vmem:[#allocation0] sm:$0x1] %vm93, %v92
    %s96 = sshllo.u32 0, 1
    %v98 = vld [vmem:[#allocation0] sm:%s96]
    %s99 = sshllo.u32 0, 1
    %100 = vst [vmem:[%s1] sm:%s99] %v98

// kernel: dense_layer_forward.1
$region0: #{dense_layer_forward.1}
  #allocation0 [shape = 'u32[]', space=smem, size = 0x4, offset = 0x4, fixed_abs, tag = 'smem constant byte address 0x4 - core index']
  #allocation1 [shape = 'u32[144,128]{1,0:T(1,128)}', space=vmem, size = 0x12000, scoped, tag = 'internal scratch']
  #allocation2 [shape = 'f32[18,576]{1,0:T(8,128)}', space=vmem, size = 0xf000, scoped, tag = 'scratch operand']
  %s0 = inlined_call_operand.vmem [shape: f32[2,16,64], index: 0, kind: input, shape index: {}]
  %s1 = inlined_call_operand.vmem [shape: f32[1,64], index: 1, kind: input, shape index: {}]
  %s2 = inlined_call_operand.vmem [shape: f32[1,64], index: 2, kind: input, shape index: {}]
  %s3 = inlined_call_operand.vmem [shape: f32[64,512], index: 3, kind: input, shape index: {}]
  %s4 = inlined_call_operand.vmem [shape: f32[1,512], index: 4, kind: input, shape index: {}]
  %s5 = inlined_call_operand.vmem [shape: f32[1,512], index: 5, kind: input, shape index: {}]
  %s6 = inlined_call_operand.vmem [shape: f32[3,576,128], index: 6, kind: input, shape index: {}]
  %s7 = inlined_call_operand.vmem [shape: f32[2,16,128], index: 7, kind: output, shape index: {}]
  %s8 = sld [smem:[#allocation0]]
  $region61: #{dense_layer_forward.1} parent=0
    _
  %s10 = ssub.s32 1, %s8
  %s11 = scalar_select 0, %s10, %s8
  loop: start=0, step=1, limit=4
  $region2: #{dense_layer_forward.1} parent=0 // loop_pre_header
    _
  $region3: #{dense_layer_forward.1} parent=0 // loop_header
    %s13 = sphi 0, %s17
    %p14 = scmp.ge.s32.totalorder %s13, 4
    %s23 = sphi 0, %s25
    %s26 = sphi 0, %s23
    %s27 = sphi 0, %s26
    %s43 = sphi 0, %s27
    %s47 = sphi 0, %s47
    %s49 = sphi 0, %s47
    %s50 = sphi 0, %s49
    %s64 = sphi 0, %s50
    %s68 = sphi 0, %s68
    %s70 = sphi 0, %s68
    %s71 = sphi 0, %s70
    %s85 = sphi 0, %s71
    %s89 = sphi 0, %s89
    %s91 = sphi 0, %s89
    %s92 = sphi 0, %s91
    %s106 = sphi 0, %s92
    %s110 = sphi 0, %s110
    %s112 = sphi 0, %s110
    %s113 = sphi 0, %s112
    %s127 = sphi 0, %s113
    %s131 = sphi 0, %s131
    %s133 = sphi 0, %s131
    %s134 = sphi 0, %s133
    %s148 = sphi 0, %s134
    %s152 = sphi 0, %s152
    %s154 = sphi 0, %s152
    %s155 = sphi 0, %s154
    %s169 = sphi 0, %s155
    %s175 = sphi 0, %s177
    %s178 = sphi 0, %s175
    %s179 = sphi 0, %s178
    %s195 = sphi 0, %s179
  $region4: #{dense_layer_forward.1} parent=0 // loop_header_branch
    %16 = sbr.rel (%p14) target = $region8
  $region5: #{dense_layer_forward.1} parent=0 // loop_body
    %s18 = ssub.s32 %s13, 1
    %s19 = ssub.s32 %s13, 2
    %s20 = sadd.s32 %s13, 1
    %s21 = ssub.s32 %s13, %s20
    %p22 = scmp.eq.s32.totalorder %s21, 0
    %s24 = sadd.s32 %s23, 1
    %s25 = scalar_select %p22, %s23, %s24
    %p28 = pneg %p22
    %p29 = scmp.eq.s32.totalorder %s13, 1
    %p30 = por %p28, %p29
    %p31 = scmp.ne.s32.totalorder %s23, %s26
    %p32 = scmp.eq.s32.totalorder %s13, 0
    %p33 = por %p31, %p32
    %p34 = scmp.ne.s32.totalorder %s23, %s26
    %p35 = scmp.eq.s32.totalorder %s18, 1
    %p36 = por %p34, %p35
    %p37 = scmp.ne.s32.totalorder %s26, %s27
    %p38 = scmp.eq.s32.totalorder %s18, 0
    %p39 = por %p37, %p38
    %p40 = scmp.ne.s32.totalorder %s26, %s27
    %p41 = scmp.eq.s32.totalorder %s19, 1
    %p42 = por %p40, %p41
    %p44 = scmp.ne.s32.totalorder %s27, %s43
    %p45 = scmp.eq.s32.totalorder %s19, 0
    %p46 = por %p44, %p45
    %s48 = sadd.s32 %s47, 1
    %p51 = scmp.eq.s32.totalorder %s13, 1
    %p52 = scmp.ne.s32.totalorder %s47, %s49
    %p53 = scmp.eq.s32.totalorder %s13, 0
    %p54 = por %p52, %p53
    %p55 = scmp.ne.s32.totalorder %s47, %s49
    %p56 = scmp.eq.s32.totalorder %s18, 1
    %p57 = por %p55, %p56
    %p58 = scmp.ne.s32.totalorder %s49, %s50
    %p59 = scmp.eq.s32.totalorder %s18, 0
    %p60 = por %p58, %p59
    %p61 = scmp.ne.s32.totalorder %s49, %s50
    %p62 = scmp.eq.s32.totalorder %s19, 1
    %p63 = por %p61, %p62
    %p65 = scmp.ne.s32.totalorder %s50, %s64
    %p66 = scmp.eq.s32.totalorder %s19, 0
    %p67 = por %p65, %p66
    %s69 = sadd.s32 %s68, 1
    %p72 = scmp.eq.s32.totalorder %s13, 1
    %p73 = scmp.ne.s32.totalorder %s68, %s70
    %p74 = scmp.eq.s32.totalorder %s13, 0
    %p75 = por %p73, %p74
    %p76 = scmp.ne.s32.totalorder %s68, %s70
    %p77 = scmp.eq.s32.totalorder %s18, 1
    %p78 = por %p76, %p77
    %p79 = scmp.ne.s32.totalorder %s70, %s71
    %p80 = scmp.eq.s32.totalorder %s18, 0
    %p81 = por %p79, %p80
    %p82 = scmp.ne.s32.totalorder %s70, %s71
    %p83 = scmp.eq.s32.totalorder %s19, 1
    %p84 = por %p82, %p83
    %p86 = scmp.ne.s32.totalorder %s71, %s85
    %p87 = scmp.eq.s32.totalorder %s19, 0
    %p88 = por %p86, %p87
    %s90 = sadd.s32 %s89, 1
    %p93 = scmp.eq.s32.totalorder %s13, 1
    %p94 = scmp.ne.s32.totalorder %s89, %s91
    %p95 = scmp.eq.s32.totalorder %s13, 0
    %p96 = por %p94, %p95
    %p97 = scmp.ne.s32.totalorder %s89, %s91
    %p98 = scmp.eq.s32.totalorder %s18, 1
    %p99 = por %p97, %p98
    %p100 = scmp.ne.s32.totalorder %s91, %s92
    %p101 = scmp.eq.s32.totalorder %s18, 0
    %p102 = por %p100, %p101
    %p103 = scmp.ne.s32.totalorder %s91, %s92
    %p104 = scmp.eq.s32.totalorder %s19, 1
    %p105 = por %p103, %p104
    %p107 = scmp.ne.s32.totalorder %s92, %s106
    %p108 = scmp.eq.s32.totalorder %s19, 0
    %p109 = por %p107, %p108
    %s111 = sadd.s32 %s110, 1
    %p114 = scmp.eq.s32.totalorder %s13, 1
    %p115 = scmp.ne.s32.totalorder %s110, %s112
    %p116 = scmp.eq.s32.totalorder %s13, 0
    %p117 = por %p115, %p116
    %p118 = scmp.ne.s32.totalorder %s110, %s112
    %p119 = scmp.eq.s32.totalorder %s18, 1
    %p120 = por %p118, %p119
    %p121 = scmp.ne.s32.totalorder %s112, %s113
    %p122 = scmp.eq.s32.totalorder %s18, 0
    %p123 = por %p121, %p122
    %p124 = scmp.ne.s32.totalorder %s112, %s113
    %p125 = scmp.eq.s32.totalorder %s19, 1
    %p126 = por %p124, %p125
    %p128 = scmp.ne.s32.totalorder %s113, %s127
    %p129 = scmp.eq.s32.totalorder %s19, 0
    %p130 = por %p128, %p129
    %s132 = sadd.s32 %s131, 1
    %p135 = scmp.eq.s32.totalorder %s13, 1
    %p136 = scmp.ne.s32.totalorder %s131, %s133
    %p137 = scmp.eq.s32.totalorder %s13, 0
    %p138 = por %p136, %p137
    %p139 = scmp.ne.s32.totalorder %s131, %s133
    %p140 = scmp.eq.s32.totalorder %s18, 1
    %p141 = por %p139, %p140
    %p142 = scmp.ne.s32.totalorder %s133, %s134
    %p143 = scmp.eq.s32.totalorder %s18, 0
    %p144 = por %p142, %p143
    %p145 = scmp.ne.s32.totalorder %s133, %s134
    %p146 = scmp.eq.s32.totalorder %s19, 1
    %p147 = por %p145, %p146
    %p149 = scmp.ne.s32.totalorder %s134, %s148
    %p150 = scmp.eq.s32.totalorder %s19, 0
    %p151 = por %p149, %p150
    %s153 = sadd.s32 %s152, 1
    %p156 = scmp.eq.s32.totalorder %s13, 1
    %p157 = scmp.ne.s32.totalorder %s152, %s154
    %p158 = scmp.eq.s32.totalorder %s13, 0
    %p159 = por %p157, %p158
    %p160 = scmp.ne.s32.totalorder %s152, %s154
    %p161 = scmp.eq.s32.totalorder %s18, 1
    %p162 = por %p160, %p161
    %p163 = scmp.ne.s32.totalorder %s154, %s155
    %p164 = scmp.eq.s32.totalorder %s18, 0
    %p165 = por %p163, %p164
    %p166 = scmp.ne.s32.totalorder %s154, %s155
    %p167 = scmp.eq.s32.totalorder %s19, 1
    %p168 = por %p166, %p167
    %p170 = scmp.ne.s32.totalorder %s155, %s169
    %p171 = scmp.eq.s32.totalorder %s19, 0
    %p172 = por %p170, %p171
    %s173 = ssub.s32 %s13, %s20
    %p174 = scmp.eq.s32.totalorder %s173, 0
    %s176 = sadd.s32 %s175, 1
    %s177 = scalar_select %p174, %s175, %s176
    %p180 = pneg %p174
    %p181 = scmp.eq.s32.totalorder %s13, 1
    %p182 = por %p180, %p181
    %p183 = scmp.ne.s32.totalorder %s175, %s178
    %p184 = scmp.eq.s32.totalorder %s13, 0
    %p185 = por %p183, %p184
    %p186 = scmp.ne.s32.totalorder %s175, %s178
    %p187 = scmp.eq.s32.totalorder %s18, 1
    %p188 = por %p186, %p187
    %p189 = scmp.ne.s32.totalorder %s178, %s179
    %p190 = scmp.eq.s32.totalorder %s18, 0
    %p191 = por %p189, %p190
    %p192 = scmp.ne.s32.totalorder %s178, %s179
    %p193 = scmp.eq.s32.totalorder %s19, 1
    %p194 = por %p192, %p193
    %p196 = scmp.ne.s32.totalorder %s179, %s195
    %p197 = scmp.eq.s32.totalorder %s19, 0
    %p198 = por %p196, %p197
    %p199 = scmp.le.s32.totalorder 1, %s13
    %p200 = scmp.lt.s32.totalorder %s13, 3
    %p201 = pnand %p199, %p200
    %p202 = pneg %p201
    // Predicated region
    $region9: #{dense_layer_forward.1} parent=5 // pred_check
      _
    $region10: #{dense_layer_forward.1} parent=5 // pred_check_branch
      %204 = sbr.rel (%p201) target = $region12
    $region11: #{dense_layer_forward.1} parent=5 // pred_region
      %s205 = ssub.s32 %s13, 1
      // Predicated region
      $region13: #{dense_layer_forward.1} parent=11 // pred_check
        %p206 = pneg %p60
      $region14: #{dense_layer_forward.1} parent=11 // pred_check_branch
        %208 = sbr.rel (%p206) target = $region16
      $region15: #{dense_layer_forward.1} parent=11 // pred_region
        _
      $region16: #{dense_layer_forward.1} parent=11 // pred_fallthru
        _
      // Predicated region
      $region17: #{dense_layer_forward.1} parent=11 // pred_check
        %p209 = pneg %p81
      $region18: #{dense_layer_forward.1} parent=11 // pred_check_branch
        %211 = sbr.rel (%p209) target = $region20
      $region19: #{dense_layer_forward.1} parent=11 // pred_region
        _
      $region20: #{dense_layer_forward.1} parent=11 // pred_fallthru
        _
      // Predicated region
      $region21: #{dense_layer_forward.1} parent=11 // pred_check
        %p212 = pneg %p102
      $region22: #{dense_layer_forward.1} parent=11 // pred_check_branch
        %214 = sbr.rel (%p212) target = $region24
      $region23: #{dense_layer_forward.1} parent=11 // pred_region
        _
      $region24: #{dense_layer_forward.1} parent=11 // pred_fallthru
        _
      // Predicated region
      $region25: #{dense_layer_forward.1} parent=11 // pred_check
        %p215 = pneg %p123
      $region26: #{dense_layer_forward.1} parent=11 // pred_check_branch
        %217 = sbr.rel (%p215) target = $region28
      $region27: #{dense_layer_forward.1} parent=11 // pred_region
        _
      $region28: #{dense_layer_forward.1} parent=11 // pred_fallthru
        _
      // Predicated region
      $region29: #{dense_layer_forward.1} parent=11 // pred_check
        %p218 = pneg %p144
      $region30: #{dense_layer_forward.1} parent=11 // pred_check_branch
        %220 = sbr.rel (%p218) target = $region32
      $region31: #{dense_layer_forward.1} parent=11 // pred_region
        _
      $region32: #{dense_layer_forward.1} parent=11 // pred_fallthru
        _
      // Predicated region
      $region33: #{dense_layer_forward.1} parent=11 // pred_check
        %p221 = pneg %p165
      $region34: #{dense_layer_forward.1} parent=11 // pred_check_branch
        %223 = sbr.rel (%p221) target = $region36
      $region35: #{dense_layer_forward.1} parent=11 // pred_region
        _
      $region36: #{dense_layer_forward.1} parent=11 // pred_fallthru
        _
    $region12: #{dense_layer_forward.1} parent=5 // pred_fallthru
      _
    %p224 = scmp.lt.s32.totalorder %s13, 2
    // Predicated region
    $region37: #{dense_layer_forward.1} parent=5 // pred_check
      %p225 = pneg %p224
    $region38: #{dense_layer_forward.1} parent=5 // pred_check_branch
      %227 = sbr.rel (%p225) target = $region40
    $region39: #{dense_layer_forward.1} parent=5 // pred_region
      // Predicated region
      $region41: #{dense_layer_forward.1} parent=39 // pred_check
        %p228 = pneg %p33
      $region42: #{dense_layer_forward.1} parent=39 // pred_check_branch
        %230 = sbr.rel (%p228) target = $region44
      $region43: #{dense_layer_forward.1} parent=39 // pred_region
        %p231 = scmp.lt.s32.totalorder %s13, 1
        %s232 = scalar_select %p231, %s13, 1
        %s233 = smul.addr %s232, 2
        %s234 = smul.addr %s233, 8
        %s235 = scalar_lea.vmem %s0, %s234
      $region44: #{dense_layer_forward.1} parent=39 // pred_fallthru
        _
    $region40: #{dense_layer_forward.1} parent=5 // pred_fallthru
      _
    %p236 = scmp.le.s32.totalorder 1, %s13
    %p237 = scmp.lt.s32.totalorder %s13, 3
    %p238 = pnand %p236, %p237
    %p239 = pneg %p238
    // Predicated region
    $region45: #{dense_layer_forward.1} parent=5 // pred_check
      _
    $region46: #{dense_layer_forward.1} parent=5 // pred_check_branch
      %241 = sbr.rel (%p238) target = $region48
    $region47: #{dense_layer_forward.1} parent=5 // pred_region
      %s242 = ssub.s32 %s13, 1
      %p243 = scmp.lt.s32.totalorder %s18, 1
      %s244 = scalar_select %p243, %s18, 1
      %s245 = smul.addr %s244, 2
      %s246 = smul.addr %s245, 8
      %s247 = scalar_lea.vmem %s0, %s246
      %p248 = pneg %p39
      %p249 = pneg %p36
      %p250 = pneg %p60
      %p251 = pneg %p57
      %p252 = pneg %p81
      %p253 = pneg %p78
      %p254 = pneg %p102
      %p255 = pneg %p99
      %p256 = pneg %p123
      %p257 = pneg %p120
      %p258 = pneg %p144
      %p259 = pneg %p141
      %p260 = pneg %p165
      %p261 = pneg %p162
      %p262 = pneg %p191
      %p263 = pneg %p188
      %p264 = scmp.lt.s32.totalorder %s18, 1
      %s265 = scalar_select %p264, %s18, 1
      %s266 = smul.addr %s265, 2
      %s267 = smul.addr %s266, 8
      %s268 = scalar_lea.vmem %s7, %s267
      %p269 = scmp.lt.s32.totalorder %s18, 1
      %s270 = scalar_select %p269, %s18, 1
      %s271 = smul.addr %s270, 2
      %s272 = smul.addr %s271, 8
      %s273 = scalar_lea.vmem %s0, %s272
      %p274 = scmp.lt.s32.totalorder %s18, 1
      %s275 = scalar_select %p274, %s18, 1
      %s276 = smul.addr %s275, 2
      %s277 = smul.addr %s276, 8
      %s278 = scalar_lea.vmem %s7, %s277
      %v279 = vlaneseq
      %vm280 = vcmp.ge.s32.totalorder %v279, 0
      %vm281 = vcmp.lt.s32.totalorder %v279, 576
      %vm282 = vmand %vm280, %vm281
      %283 = vst.msk [vmem:[#allocation2] ss:$8 sm:$0xf] %vm282, 0.0
      %284 = vst.msk [vmem:[#allocation2] ss:$8 sm:$0x10] %vm282, 0.0
      %s285 = scalar_lea.vmem [#allocation2], 81
      %286 = vst.msk [vmem:[%s285] ss:$8 sm:$0xf] %vm282, 0.0
      %287 = vst.msk [vmem:[%s285] ss:$8 sm:$0x10] %vm282, 0.0
      %vm288 = vcmask 261120
      %289 = vst.msk [vmem:[#allocation2] sm:$0xff] %vm288, 0.0
      %290 = vst.msk [vmem:[#allocation2 + $0x28] sm:$0xff] %vm288, 0.0
      %vm291 = vcmask 254976
      %292 = vst.msk [vmem:[#allocation2 + $0x50] sm:$0x3] %vm291, 0.0
      %vm293 = vcmask 523520
      %294 = vst.msk [vmem:[#allocation2 + $0x20] sm:$0xff] %vm293, 0.0
      %295 = vst.msk [vmem:[#allocation2 + $0x48] sm:$0xff] %vm293, 0.0
      %vm296 = vcmask 517376
      %297 = vst.msk [vmem:[#allocation2 + $0x70] sm:$0x3] %vm296, 0.0
      %v298 = vld [vmem:[%s273] sm:$0xff]
      %v299 = vld [vmem:[%s273 + $0x8] sm:$0xff]
      %v300 = vld [vmem:[%s1] sm:$0x1]
      %v302 = vlaneseq
      %v303 = vshrl.u32 %v302, 7
      %v304 = vsub.s32 0, %v303
      %v305 = vrot.slane %v300, %v304
      %v307 = vmul.f32 %v298, %v305
      %v308 = vmul.f32 %v299, %v305
      %v309 = vld [vmem:[%s2] sm:$0x1]
      %v311 = vlaneseq
      %v312 = vshrl.u32 %v311, 7
      %v313 = vsub.s32 0, %v312
      %v314 = vrot.slane %v309, %v313
      %v316 = vadd.f32 %v307, %v314
      %v317 = vadd.f32 %v308, %v314
      %v318 = vmax.f32 %v316, 0.0
      %v319 = vmax.f32 %v317, 0.0
      %v320 = vld [vmem:[%s3] sm:$0xff]
      %v321 = vld [vmem:[%s3 + $0x8] sm:$0xff]
      %v322 = vld [vmem:[%s3 + $0x10] sm:$0xff]
      %v323 = vld [vmem:[%s3 + $0x18] sm:$0xff]
      %v324 = vld [vmem:[%s3 + $0x20] sm:$0xff]
      %v325 = vld [vmem:[%s3 + $0x28] sm:$0xff]
      %v326 = vld [vmem:[%s3 + $0x30] sm:$0xff]
      %v327 = vld [vmem:[%s3 + $0x38] sm:$0xff]
      %v328 = vld [vmem:[%s3 + $0x40] sm:$0xff]
      %v329 = vld [vmem:[%s3 + $0x48] sm:$0xff]
      %v330 = vld [vmem:[%s3 + $0x50] sm:$0xff]
      %v331 = vld [vmem:[%s3 + $0x58] sm:$0xff]
      %v332 = vld [vmem:[%s3 + $0x60] sm:$0xff]
      %v333 = vld [vmem:[%s3 + $0x68] sm:$0xff]
      %v334 = vld [vmem:[%s3 + $0x70] sm:$0xff]
      %v335 = vld [vmem:[%s3 + $0x78] sm:$0xff]
      %v336 = vld [vmem:[%s3 + $0x80] sm:$0xff]
      %v337 = vld [vmem:[%s3 + $0x88] sm:$0xff]
      %v338 = vld [vmem:[%s3 + $0x90] sm:$0xff]
      %v339 = vld [vmem:[%s3 + $0x98] sm:$0xff]
      %v340 = vld [vmem:[%s3 + $0xa0] sm:$0xff]
      %v341 = vld [vmem:[%s3 + $0xa8] sm:$0xff]
      %v342 = vld [vmem:[%s3 + $0xb0] sm:$0xff]
      %v343 = vld [vmem:[%s3 + $0xb8] sm:$0xff]
      %v344 = vld [vmem:[%s3 + $0xc0] sm:$0xff]
      %v345 = vld [vmem:[%s3 + $0xc8] sm:$0xff]
      %v346 = vld [vmem:[%s3 + $0xd0] sm:$0xff]
      %v347 = vld [vmem:[%s3 + $0xd8] sm:$0xff]
      %v348 = vld [vmem:[%s3 + $0xe0] sm:$0xff]
      %v349 = vld [vmem:[%s3 + $0xe8] sm:$0xff]
      %v350 = vld [vmem:[%s3 + $0xf0] sm:$0xff]
      %v351 = vld [vmem:[%s3 + $0xf8] sm:$0xff]
      %vm352 = vcmask 523264
      %v354 = vsel %vm352, %v318, 0
      %v357 = vsel %vm352, %v319, 0
      %359 = vmatprep.subr.mxu0 %v321
      %360 = vmatpush1.msra.mxu0 %v320
      %361 = vmatprep.subr.mxu0 %v325
      %362 = vmatpush1.msra.mxu0 %v324
      %363 = vmatprep.subr.mxu0 %v329
      %364 = vmatpush1.msra.mxu0 %v328
      %365 = vmatprep.subr.mxu0 %v333
      %366 = vmatpush1.msra.mxu0 %v332
      %367 = vmatprep.subr.mxu0 %v337
      %368 = vmatpush1.msra.mxu0 %v336
      %369 = vmatprep.subr.mxu0 %v341
      %370 = vmatpush1.msra.mxu0 %v340
      %371 = vmatprep.subr.mxu0 %v345
      %372 = vmatpush1.msra.mxu0 %v344
      %373 = vmatprep.subr.mxu0 %v349
      %374 = vmatpush1.msra.mxu0 %v348
      %375 = vmatprep.subr.mxu0 0.0
      %376 = vmatpush1.msra.mxu0 0.0
      %377 = vmatprep.subr.mxu0 0.0
      %378 = vmatpush1.msra.mxu0 0.0
      %379 = vmatprep.subr.mxu0 0.0
      %380 = vmatpush1.msra.mxu0 0.0
      %381 = vmatprep.subr.mxu0 0.0
      %382 = vmatpush1.msra.mxu0 0.0
      %383 = vmatprep.subr.mxu0 0.0
      %384 = vmatpush1.msra.mxu0 0.0
      %385 = vmatprep.subr.mxu0 0.0
      %386 = vmatpush1.msra.mxu0 0.0
      %387 = vmatprep.subr.mxu0 0.0
      %388 = vmatpush1.msra.mxu0 0.0
      %389 = vmatprep.subr.mxu0 0.0
      %390 = vmatpush1.msra.mxu0 0.0
      %391 = vmatprep.subr.mxu0 0.0
      %392 = vmatpush1.msra.mxu0 0.0
      %393 = vmatprep.subr.mxu0 0.0
      %394 = vmatpush1.msra.mxu0 0.0
      %395 = vmatprep.subr.mxu0 0.0
      %396 = vmatpush1.msra.mxu0 0.0
      %397 = vmatprep.subr.mxu0 0.0
      %398 = vmatpush1.msra.mxu0 0.0
      %399 = vmatprep.subr.mxu0 0.0
      %400 = vmatpush1.msra.mxu0 0.0
      %401 = vmatprep.subr.mxu0 0.0
      %402 = vmatpush1.msra.mxu0 0.0
      %403 = vmatprep.subr.mxu0 0.0
      %404 = vmatpush1.msra.mxu0 0.0
      %405 = vmatprep.subr.mxu0 0.0
      %406 = vmatpush1.msra.mxu0 0.0
      %407 = vmatprep.subr.mxu0 0.0
      %408 = vmatpush1.msra.mxu0 0.0
      %409 = vmatprep.subr.mxu0 0.0
      %410 = vmatpush1.msra.mxu0 0.0
      %411 = vmatprep.subr.mxu0 0.0
      %412 = vmatpush1.msra.mxu0 0.0
      %413 = vmatprep.subr.mxu0 0.0
      %414 = vmatpush1.msra.mxu0 0.0
      %415 = vmatprep.subr.mxu0 0.0
      %416 = vmatpush1.msra.mxu0 0.0
      %417 = vmatprep.subr.mxu0 0.0
      %418 = vmatpush1.msra.mxu0 0.0
      %419 = vmatprep.subr.mxu0 0.0
      %420 = vmatpush1.msra.mxu0 0.0
      %421 = vmatprep.subr.mxu0 0.0
      %422 = vmatpush1.msra.mxu0 0.0
      %423 = vmatprep.mubr.f32.mxu0 0.0
      %424 = vmatmul.mubr.f32.gmra.mrb[0].mxu0 %v354
      %v425 = vpop.f32.mrb[0].mxu0
      %v426 = vadd.f32 0.0, %v425
      %v427 = vpop.f32.mrb[0].mxu0
      %v428 = vadd.f32 0.0, %v427
      %429 = vmatprep.mubr.f32.mxu0 0.0
      %430 = vmatmul.mubr.f32.gmra.mrb[0].mxu0 %v357
      %v431 = vpop.f32.mrb[0].mxu0
      %v432 = vadd.f32 0.0, %v431
      %v433 = vpop.f32.mrb[0].mxu0
      %v434 = vadd.f32 0.0, %v433
      %435 = vdwg.mxu0
      %436 = vmatprep.subr.mxu0 %v323
      %437 = vmatpush1.msra.mxu0 %v322
      %438 = vmatprep.subr.mxu0 %v327
      %439 = vmatpush1.msra.mxu0 %v326
      %440 = vmatprep.subr.mxu0 %v331
      %441 = vmatpush1.msra.mxu0 %v330
      %442 = vmatprep.subr.mxu0 %v335
      %443 = vmatpush1.msra.mxu0 %v334
      %444 = vmatprep.subr.mxu0 %v339
      %445 = vmatpush1.msra.mxu0 %v338
      %446 = vmatprep.subr.mxu0 %v343
      %447 = vmatpush1.msra.mxu0 %v342
      %448 = vmatprep.subr.mxu0 %v347
      %449 = vmatpush1.msra.mxu0 %v346
      %450 = vmatprep.subr.mxu0 %v351
      %451 = vmatpush1.msra.mxu0 %v350
      %452 = vmatprep.subr.mxu0 0.0
      %453 = vmatpush1.msra.mxu0 0.0
      %454 = vmatprep.subr.mxu0 0.0
      %455 = vmatpush1.msra.mxu0 0.0
      %456 = vmatprep.subr.mxu0 0.0
      %457 = vmatpush1.msra.mxu0 0.0
      %458 = vmatprep.subr.mxu0 0.0
      %459 = vmatpush1.msra.mxu0 0.0
      %460 = vmatprep.subr.mxu0 0.0
      %461 = vmatpush1.msra.mxu0 0.0
      %462 = vmatprep.subr.mxu0 0.0
      %463 = vmatpush1.msra.mxu0 0.0
      %464 = vmatprep.subr.mxu0 0.0
      %465 = vmatpush1.msra.mxu0 0.0
      %466 = vmatprep.subr.mxu0 0.0
      %467 = vmatpush1.msra.mxu0 0.0
      %468 = vmatprep.subr.mxu0 0.0
      %469 = vmatpush1.msra.mxu0 0.0
      %470 = vmatprep.subr.mxu0 0.0
      %471 = vmatpush1.msra.mxu0 0.0
      %472 = vmatprep.subr.mxu0 0.0
      %473 = vmatpush1.msra.mxu0 0.0
      %474 = vmatprep.subr.mxu0 0.0
      %475 = vmatpush1.msra.mxu0 0.0
      %476 = vmatprep.subr.mxu0 0.0
      %477 = vmatpush1.msra.mxu0 0.0
      %478 = vmatprep.subr.mxu0 0.0
      %479 = vmatpush1.msra.mxu0 0.0
      %480 = vmatprep.subr.mxu0 0.0
      %481 = vmatpush1.msra.mxu0 0.0
      %482 = vmatprep.subr.mxu0 0.0
      %483 = vmatpush1.msra.mxu0 0.0
      %484 = vmatprep.subr.mxu0 0.0
      %485 = vmatpush1.msra.mxu0 0.0
      %486 = vmatprep.subr.mxu0 0.0
      %487 = vmatpush1.msra.mxu0 0.0
      %488 = vmatprep.subr.mxu0 0.0
      %489 = vmatpush1.msra.mxu0 0.0
      %490 = vmatprep.subr.mxu0 0.0
      %491 = vmatpush1.msra.mxu0 0.0
      %492 = vmatprep.subr.mxu0 0.0
      %493 = vmatpush1.msra.mxu0 0.0
      %494 = vmatprep.subr.mxu0 0.0
      %495 = vmatpush1.msra.mxu0 0.0
      %496 = vmatprep.subr.mxu0 0.0
      %497 = vmatpush1.msra.mxu0 0.0
      %498 = vmatprep.subr.mxu0 0.0
      %499 = vmatpush1.msra.mxu0 0.0
      %500 = vmatprep.mubr.f32.mxu0 0.0
      %501 = vmatmul.mubr.f32.gmra.mrb[0].mxu0 %v354
      %v502 = vpop.f32.mrb[0].mxu0
      %v503 = vadd.f32 0.0, %v502
      %v504 = vpop.f32.mrb[0].mxu0
      %v505 = vadd.f32 0.0, %v504
      %506 = vmatprep.mubr.f32.mxu0 0.0
      %507 = vmatmul.mubr.f32.gmra.mrb[0].mxu0 %v357
      %v508 = vpop.f32.mrb[0].mxu0
      %v509 = vadd.f32 0.0, %v508
      %v510 = vpop.f32.mrb[0].mxu0
      %v511 = vadd.f32 0.0, %v510
      %512 = vdwg.mxu0
      %v513 = vld [vmem:[%s4] sm:$0xf]
      %v515 = vlaneseq
      %v516 = vshrl.u32 %v515, 7
      %v517 = vsub.s32 0, %v516
      %v518 = vrot.slane %v513, %v517
      %v519 = vlaneseq
      %v520 = vshrl.u32 %v519, 7
      %v521 = vsub.s32 1, %v520
      %v522 = vrot.slane %v513, %v521
      %v523 = vlaneseq
      %v524 = vshrl.u32 %v523, 7
      %v525 = vsub.s32 2, %v524
      %v526 = vrot.slane %v513, %v525
      %v527 = vlaneseq
      %v528 = vshrl.u32 %v527, 7
      %v529 = vsub.s32 3, %v528
      %v530 = vrot.slane %v513, %v529
      %v535 = vmul.f32 %v426, %v518
      %v536 = vmul.f32 %v428, %v522
      %v537 = vmul.f32 %v503, %v526
      %v538 = vmul.f32 %v505, %v530
      %v539 = vmul.f32 %v432, %v518
      %v540 = vmul.f32 %v434, %v522
      %v541 = vmul.f32 %v509, %v526
      %v542 = vmul.f32 %v511, %v530
      %v543 = vld [vmem:[%s5] sm:$0xf]
      %v545 = vlaneseq
      %v546 = vshrl.u32 %v545, 7
      %v547 = vsub.s32 0, %v546
      %v548 = vrot.slane %v543, %v547
      %v549 = vlaneseq
      %v550 = vshrl.u32 %v549, 7
      %v551 = vsub.s32 1, %v550
      %v552 = vrot.slane %v543, %v551
      %v553 = vlaneseq
      %v554 = vshrl.u32 %v553, 7
      %v555 = vsub.s32 2, %v554
      %v556 = vrot.slane %v543, %v555
      %v557 = vlaneseq
      %v558 = vshrl.u32 %v557, 7
      %v559 = vsub.s32 3, %v558
      %v560 = vrot.slane %v543, %v559
      %v565 = vadd.f32 %v535, %v548
      %v566 = vadd.f32 %v536, %v552
      %v567 = vadd.f32 %v537, %v556
      %v568 = vadd.f32 %v538, %v560
      %v569 = vadd.f32 %v539, %v548
      %v570 = vadd.f32 %v540, %v552
      %v571 = vadd.f32 %v541, %v556
      %v572 = vadd.f32 %v542, %v560
      %v573 = vmax.f32 %v565, 0.0
      %v574 = vmax.f32 %v566, 0.0
      %v575 = vmax.f32 %v567, 0.0
      %v576 = vmax.f32 %v568, 0.0
      %v577 = vmax.f32 %v569, 0.0
      %v578 = vmax.f32 %v570, 0.0
      %v579 = vmax.f32 %v571, 0.0
      %v580 = vmax.f32 %v572, 0.0
      %vm589 = vcmask 1040384
      %v590 = vrot.slane %v573, 7
      %v591 = vrot.slane %v574, 7
      %v592 = vrot.slane %v575, 7
      %v593 = vrot.slane %v576, 7
      %v594 = vrot.slane %v577, 7
      %v595 = vsel %vm589, %v590, %v594
      %v596 = vrot.slane %v578, 7
      %v597 = vsel %vm589, %v591, %v596
      %v598 = vrot.slane %v579, 7
      %v599 = vsel %vm589, %v592, %v598
      %v600 = vrot.slane %v580, 7
      %v601 = vsel %vm589, %v593, %v600
      %602 = vrot.lane.b32.xlu0 %v590, 32
      %v603 = vpop.permute.xlu0 %602
      %604 = vrot.lane.b32.xlu0 %v591, 32
      %v605 = vpop.permute.xlu0 %604
      %606 = vrot.lane.b32.xlu0 %v592, 32
      %v607 = vpop.permute.xlu0 %606
      %608 = vrot.lane.b32.xlu0 %v593, 32
      %v609 = vpop.permute.xlu0 %608
      %610 = vrot.lane.b32.xlu0 %v595, 32
      %v611 = vpop.permute.xlu0 %610
      %612 = vrot.lane.b32.xlu0 %v597, 32
      %v613 = vpop.permute.xlu0 %612
      %614 = vrot.lane.b32.xlu0 %v599, 32
      %v615 = vpop.permute.xlu0 %614
      %616 = vrot.lane.b32.xlu0 %v601, 32
      %v617 = vpop.permute.xlu0 %616
      %618 = vrot.lane.b32.xlu0 %v594, 32
      %v619 = vpop.permute.xlu0 %618
      %620 = vrot.lane.b32.xlu0 %v596, 32
      %v621 = vpop.permute.xlu0 %620
      %622 = vrot.lane.b32.xlu0 %v598, 32
      %v623 = vpop.permute.xlu0 %622
      %624 = vrot.lane.b32.xlu0 %v600, 32
      %v625 = vpop.permute.xlu0 %624
      %v626 = vsel %vm288, %v603, %v605
      %v627 = vsel %vm288, %v605, %v607
      %v628 = vsel %vm288, %v607, %v609
      %v629 = vsel %vm288, %v611, %v613
      %v630 = vsel %vm288, %v613, %v615
      %v631 = vsel %vm288, %v615, %v617
      %v632 = vsel %vm288, %v619, %v621
      %v633 = vsel %vm288, %v621, %v623
      %v634 = vsel %vm288, %v623, %v625
      %vm650 = vcmask 1047809
      %651 = vst.msk [vmem:[#allocation2] sm:$0xfe] %vm650, %v603
      %652 = vst [vmem:[#allocation2 + $0x8] sm:$0xfe] %v626
      %653 = vst [vmem:[#allocation2 + $0x10] sm:$0xfe] %v627
      %654 = vst [vmem:[#allocation2 + $0x18] sm:$0xfe] %v628
      %vm655 = vcmask 261121
      %656 = vst.msk [vmem:[#allocation2 + $0x20] sm:$0xfe] %vm655, %v609
      %vm657 = vcmask 1047808
      %658 = vst.msk [vmem:[#allocation2 + $0x28] sm:$0xff] %vm657, %v611
      %659 = vst [vmem:[#allocation2 + $0x30] sm:$0xff] %v629
      %660 = vst [vmem:[#allocation2 + $0x38] sm:$0xff] %v630
      %661 = vst [vmem:[#allocation2 + $0x40] sm:$0xff] %v631
      %662 = vst.msk [vmem:[#allocation2 + $0x48] sm:$0xff] %vm288, %v617
      %vm663 = vcmask 1040640
      %664 = vst.msk [vmem:[#allocation2 + $0x50] sm:$0x1] %vm663, %v619
      %665 = vst [vmem:[#allocation2 + $0x58] sm:$0x1] %v632
      %666 = vst [vmem:[#allocation2 + $0x60] sm:$0x1] %v633
      %667 = vst [vmem:[#allocation2 + $0x68] sm:$0x1] %v634
      %vm668 = vcmask 253952
      %669 = vst.msk [vmem:[#allocation2 + $0x70] sm:$0x1] %vm668, %v625
      %v670 = vld [vmem:[#allocation2] sm:$0xff]
      %v671 = vld [vmem:[#allocation2 + $0x8] sm:$0xff]
      %v672 = vld [vmem:[#allocation2 + $0x10] sm:$0xff]
      %v673 = vld [vmem:[#allocation2 + $0x18] sm:$0xff]
      %v674 = vld [vmem:[#allocation2 + $0x20] sm:$0xff]
      %v675 = vld [vmem:[#allocation2 + $0x28] sm:$0xff]
      %v676 = vld [vmem:[#allocation2 + $0x30] sm:$0xff]
      %v677 = vld [vmem:[#allocation2 + $0x38] sm:$0xff]
      %v678 = vld [vmem:[#allocation2 + $0x40] sm:$0xff]
      %v679 = vld [vmem:[#allocation2 + $0x48] sm:$0xff]
      %v680 = vld [vmem:[%s6] sm:$0xff]
      %v681 = vld [vmem:[%s6 + $0x8] sm:$0xff]
      %v682 = vld [vmem:[%s6 + $0x10] sm:$0xff]
      %v683 = vld [vmem:[%s6 + $0x18] sm:$0xff]
      %v684 = vld [vmem:[%s6 + $0x20] sm:$0xff]
      %v685 = vld [vmem:[%s6 + $0x28] sm:$0xff]
      %v686 = vld [vmem:[%s6 + $0x30] sm:$0xff]
      %v687 = vld [vmem:[%s6 + $0x38] sm:$0xff]
      %v688 = vld [vmem:[%s6 + $0x40] sm:$0xff]
      %v689 = vld [vmem:[%s6 + $0x48] sm:$0xff]
      %v690 = vld [vmem:[%s6 + $0x50] sm:$0xff]
      %v691 = vld [vmem:[%s6 + $0x58] sm:$0xff]
      %v692 = vld [vmem:[%s6 + $0x60] sm:$0xff]
      %v693 = vld [vmem:[%s6 + $0x68] sm:$0xff]
      %v694 = vld [vmem:[%s6 + $0x70] sm:$0xff]
      %v695 = vld [vmem:[%s6 + $0x78] sm:$0xff]
      %v696 = vld [vmem:[%s6 + $0x80] sm:$0xff]
      %v697 = vld [vmem:[%s6 + $0x88] sm:$0xff]
      %v698 = vld [vmem:[%s6 + $0x90] sm:$0xff]
      %v699 = vld [vmem:[%s6 + $0x98] sm:$0xff]
      %v700 = vld [vmem:[%s6 + $0xa0] sm:$0xff]
      %v701 = vld [vmem:[%s6 + $0xa8] sm:$0xff]
      %v702 = vld [vmem:[%s6 + $0xb0] sm:$0xff]
      %v703 = vld [vmem:[%s6 + $0xb8] sm:$0xff]
      %v704 = vld [vmem:[%s6 + $0xc0] sm:$0xff]
      %v705 = vld [vmem:[%s6 + $0xc8] sm:$0xff]
      %v706 = vld [vmem:[%s6 + $0xd0] sm:$0xff]
      %v707 = vld [vmem:[%s6 + $0xd8] sm:$0xff]
      %v708 = vld [vmem:[%s6 + $0xe0] sm:$0xff]
      %v709 = vld [vmem:[%s6 + $0xe8] sm:$0xff]
      %v710 = vld [vmem:[%s6 + $0xf0] sm:$0xff]
      %v711 = vld [vmem:[%s6 + $0xf8] sm:$0xff]
      %v712 = vld [vmem:[%s6 + $0x100] sm:$0xff]
      %v713 = vld [vmem:[%s6 + $0x108] sm:$0xff]
      %v714 = vld [vmem:[%s6 + $0x110] sm:$0xff]
      %v715 = vld [vmem:[%s6 + $0x118] sm:$0xff]
      %v716 = vld [vmem:[%s6 + $0x120] sm:$0xff]
      %v717 = vld [vmem:[%s6 + $0x128] sm:$0xff]
      %v718 = vld [vmem:[%s6 + $0x130] sm:$0xff]
      %v719 = vld [vmem:[%s6 + $0x138] sm:$0xff]
      %v720 = vld [vmem:[%s6 + $0x140] sm:$0xff]
      %v721 = vld [vmem:[%s6 + $0x148] sm:$0xff]
      %v722 = vld [vmem:[%s6 + $0x150] sm:$0xff]
      %v723 = vld [vmem:[%s6 + $0x158] sm:$0xff]
      %v724 = vld [vmem:[%s6 + $0x160] sm:$0xff]
      %v725 = vld [vmem:[%s6 + $0x168] sm:$0xff]
      %v726 = vld [vmem:[%s6 + $0x170] sm:$0xff]
      %v727 = vld [vmem:[%s6 + $0x178] sm:$0xff]
      %v728 = vld [vmem:[%s6 + $0x180] sm:$0xff]
      %v729 = vld [vmem:[%s6 + $0x188] sm:$0xff]
      %v730 = vld [vmem:[%s6 + $0x190] sm:$0xff]
      %v731 = vld [vmem:[%s6 + $0x198] sm:$0xff]
      %v732 = vld [vmem:[%s6 + $0x1a0] sm:$0xff]
      %v733 = vld [vmem:[%s6 + $0x1a8] sm:$0xff]
      %v734 = vld [vmem:[%s6 + $0x1b0] sm:$0xff]
      %v735 = vld [vmem:[%s6 + $0x1b8] sm:$0xff]
      %v736 = vld [vmem:[%s6 + $0x1c0] sm:$0xff]
      %v737 = vld [vmem:[%s6 + $0x1c8] sm:$0xff]
      %v738 = vld [vmem:[%s6 + $0x1d0] sm:$0xff]
      %v739 = vld [vmem:[%s6 + $0x1d8] sm:$0xff]
      %v740 = vld [vmem:[%s6 + $0x1e0] sm:$0xff]
      %v741 = vld [vmem:[%s6 + $0x1e8] sm:$0xff]
      %v742 = vld [vmem:[%s6 + $0x1f0] sm:$0xff]
      %v743 = vld [vmem:[%s6 + $0x1f8] sm:$0xff]
      %v744 = vld [vmem:[%s6 + $0x200] sm:$0xff]
      %v745 = vld [vmem:[%s6 + $0x208] sm:$0xff]
      %v746 = vld [vmem:[%s6 + $0x210] sm:$0xff]
      %v747 = vld [vmem:[%s6 + $0x218] sm:$0xff]
      %v748 = vld [vmem:[%s6 + $0x220] sm:$0xff]
      %v749 = vld [vmem:[%s6 + $0x228] sm:$0xff]
      %v750 = vld [vmem:[%s6 + $0x230] sm:$0xff]
      %v751 = vld [vmem:[%s6 + $0x238] sm:$0xff]
      %v752 = vld [vmem:[#allocation2] sm:$0xfe]
      %v753 = vld [vmem:[#allocation2 + $0x8] sm:$0xfe]
      %v754 = vld [vmem:[#allocation2 + $0x10] sm:$0xfe]
      %v755 = vld [vmem:[#allocation2 + $0x18] sm:$0xfe]
      %v756 = vld [vmem:[#allocation2 + $0x20] sm:$0xfe]
      %v757 = vld [vmem:[#allocation2 + $0x50] sm:$0x1]
      %v758 = vld [vmem:[#allocation2 + $0x58] sm:$0x1]
      %v759 = vld [vmem:[#allocation2 + $0x60] sm:$0x1]
      %v760 = vld [vmem:[#allocation2 + $0x68] sm:$0x1]
      %v761 = vld [vmem:[#allocation2 + $0x70] sm:$0x1]
      %s762 = scalar_lea.vmem %s6, 576
      %v763 = vld [vmem:[%s762] sm:$0xff]
      %v764 = vld [vmem:[%s762 + $0x8] sm:$0xff]
      %v765 = vld [vmem:[%s762 + $0x10] sm:$0xff]
      %v766 = vld [vmem:[%s762 + $0x18] sm:$0xff]
      %v767 = vld [vmem:[%s762 + $0x20] sm:$0xff]
      %v768 = vld [vmem:[%s762 + $0x28] sm:$0xff]
      %v769 = vld [vmem:[%s762 + $0x30] sm:$0xff]
      %v770 = vld [vmem:[%s762 + $0x38] sm:$0xff]
      %v771 = vld [vmem:[%s762 + $0x40] sm:$0xff]
      %v772 = vld [vmem:[%s762 + $0x48] sm:$0xff]
      %v773 = vld [vmem:[%s762 + $0x50] sm:$0xff]
      %v774 = vld [vmem:[%s762 + $0x58] sm:$0xff]
      %v775 = vld [vmem:[%s762 + $0x60] sm:$0xff]
      %v776 = vld [vmem:[%s762 + $0x68] sm:$0xff]
      %v777 = vld [vmem:[%s762 + $0x70] sm:$0xff]
      %v778 = vld [vmem:[%s762 + $0x78] sm:$0xff]
      %v779 = vld [vmem:[%s762 + $0x80] sm:$0xff]
      %v780 = vld [vmem:[%s762 + $0x88] sm:$0xff]
      %v781 = vld [vmem:[%s762 + $0x90] sm:$0xff]
      %v782 = vld [vmem:[%s762 + $0x98] sm:$0xff]
      %v783 = vld [vmem:[%s762 + $0xa0] sm:$0xff]
      %v784 = vld [vmem:[%s762 + $0xa8] sm:$0xff]
      %v785 = vld [vmem:[%s762 + $0xb0] sm:$0xff]
      %v786 = vld [vmem:[%s762 + $0xb8] sm:$0xff]
      %v787 = vld [vmem:[%s762 + $0xc0] sm:$0xff]
      %v788 = vld [vmem:[%s762 + $0xc8] sm:$0xff]
      %v789 = vld [vmem:[%s762 + $0xd0] sm:$0xff]
      %v790 = vld [vmem:[%s762 + $0xd8] sm:$0xff]
      %v791 = vld [vmem:[%s762 + $0xe0] sm:$0xff]
      %v792 = vld [vmem:[%s762 + $0xe8] sm:$0xff]
      %v793 = vld [vmem:[%s762 + $0xf0] sm:$0xff]
      %v794 = vld [vmem:[%s762 + $0xf8] sm:$0xff]
      %v795 = vld [vmem:[%s762 + $0x100] sm:$0xff]
      %v796 = vld [vmem:[%s762 + $0x108] sm:$0xff]
      %v797 = vld [vmem:[%s762 + $0x110] sm:$0xff]
      %v798 = vld [vmem:[%s762 + $0x118] sm:$0xff]
      %v799 = vld [vmem:[%s762 + $0x120] sm:$0xff]
      %v800 = vld [vmem:[%s762 + $0x128] sm:$0xff]
      %v801 = vld [vmem:[%s762 + $0x130] sm:$0xff]
      %v802 = vld [vmem:[%s762 + $0x138] sm:$0xff]
      %v803 = vld [vmem:[%s762 + $0x140] sm:$0xff]
      %v804 = vld [vmem:[%s762 + $0x148] sm:$0xff]
      %v805 = vld [vmem:[%s762 + $0x150] sm:$0xff]
      %v806 = vld [vmem:[%s762 + $0x158] sm:$0xff]
      %v807 = vld [vmem:[%s762 + $0x160] sm:$0xff]
      %v808 = vld [vmem:[%s762 + $0x168] sm:$0xff]
      %v809 = vld [vmem:[%s762 + $0x170] sm:$0xff]
      %v810 = vld [vmem:[%s762 + $0x178] sm:$0xff]
      %v811 = vld [vmem:[%s762 + $0x180] sm:$0xff]
      %v812 = vld [vmem:[%s762 + $0x188] sm:$0xff]
      %v813 = vld [vmem:[%s762 + $0x190] sm:$0xff]
      %v814 = vld [vmem:[%s762 + $0x198] sm:$0xff]
      %v815 = vld [vmem:[%s762 + $0x1a0] sm:$0xff]
      %v816 = vld [vmem:[%s762 + $0x1a8] sm:$0xff]
      %v817 = vld [vmem:[%s762 + $0x1b0] sm:$0xff]
      %v818 = vld [vmem:[%s762 + $0x1b8] sm:$0xff]
      %v819 = vld [vmem:[%s762 + $0x1c0] sm:$0xff]
      %v820 = vld [vmem:[%s762 + $0x1c8] sm:$0xff]
      %v821 = vld [vmem:[%s762 + $0x1d0] sm:$0xff]
      %v822 = vld [vmem:[%s762 + $0x1d8] sm:$0xff]
      %v823 = vld [vmem:[%s762 + $0x1e0] sm:$0xff]
      %v824 = vld [vmem:[%s762 + $0x1e8] sm:$0xff]
      %v825 = vld [vmem:[%s762 + $0x1f0] sm:$0xff]
      %v826 = vld [vmem:[%s762 + $0x1f8] sm:$0xff]
      %v827 = vld [vmem:[%s762 + $0x200] sm:$0xff]
      %v828 = vld [vmem:[%s762 + $0x208] sm:$0xff]
      %v829 = vld [vmem:[%s762 + $0x210] sm:$0xff]
      %v830 = vld [vmem:[%s762 + $0x218] sm:$0xff]
      %v831 = vld [vmem:[%s762 + $0x220] sm:$0xff]
      %v832 = vld [vmem:[%s762 + $0x228] sm:$0xff]
      %v833 = vld [vmem:[%s762 + $0x230] sm:$0xff]
      %v834 = vld [vmem:[%s762 + $0x238] sm:$0xff]
      %vm850 = vcmask 1046528
      %v851 = vrot.slane %v752, 1
      %v852 = vrot.slane %v675, 1
      %v853 = vsel %vm850, %v851, %v852
      %v854 = vrot.slane %v753, 1
      %v855 = vrot.slane %v676, 1
      %v856 = vsel %vm850, %v854, %v855
      %v857 = vrot.slane %v754, 1
      %v858 = vrot.slane %v677, 1
      %v859 = vsel %vm850, %v857, %v858
      %v860 = vrot.slane %v755, 1
      %v861 = vrot.slane %v678, 1
      %v862 = vsel %vm850, %v860, %v861
      %v863 = vrot.slane %v756, 1
      %v864 = vrot.slane %v679, 1
      %v865 = vsel %vm850, %v863, %v864
      %v866 = vrot.slane %v757, 1
      %v867 = vsel %vm850, %v852, %v866
      %v868 = vrot.slane %v758, 1
      %v869 = vsel %vm850, %v855, %v868
      %v870 = vrot.slane %v759, 1
      %v871 = vsel %vm850, %v858, %v870
      %v872 = vrot.slane %v760, 1
      %v873 = vsel %vm850, %v861, %v872
      %v874 = vrot.slane %v761, 1
      %v875 = vsel %vm850, %v864, %v874
      %v884 = vsel %vm352, %v865, 0
      %v886 = vsel %vm352, %v875, 0
      %888 = vmatprep.subr.mxu0 0.0
      %889 = vmatpush1.msra.mxu0 %v763
      %890 = vmatprep.subr.mxu0 0.0
      %891 = vmatpush1.msra.mxu0 %v764
      %892 = vmatprep.subr.mxu0 0.0
      %893 = vmatpush1.msra.mxu0 %v765
      %894 = vmatprep.subr.mxu0 0.0
      %895 = vmatpush1.msra.mxu0 %v766
      %896 = vmatprep.subr.mxu0 0.0
      %897 = vmatpush1.msra.mxu0 %v767
      %898 = vmatprep.subr.mxu0 0.0
      %899 = vmatpush1.msra.mxu0 %v768
      %900 = vmatprep.subr.mxu0 0.0
      %901 = vmatpush1.msra.mxu0 %v769
      %902 = vmatprep.subr.mxu0 0.0
      %903 = vmatpush1.msra.mxu0 %v770
      %904 = vmatprep.subr.mxu0 0.0
      %905 = vmatpush1.msra.mxu0 %v771
      %906 = vmatprep.subr.mxu0 0.0
      %907 = vmatpush1.msra.mxu0 %v772
      %908 = vmatprep.subr.mxu0 0.0
      %909 = vmatpush1.msra.mxu0 %v773
      %910 = vmatprep.subr.mxu0 0.0
      %911 = vmatpush1.msra.mxu0 %v774
      %912 = vmatprep.subr.mxu0 0.0
      %913 = vmatpush1.msra.mxu0 %v775
      %914 = vmatprep.subr.mxu0 0.0
      %915 = vmatpush1.msra.mxu0 %v776
      %916 = vmatprep.subr.mxu0 0.0
      %917 = vmatpush1.msra.mxu0 %v777
      %918 = vmatprep.subr.mxu0 0.0
      %919 = vmatpush1.msra.mxu0 %v778
      %920 = vmatprep.subr.mxu0 0.0
      %921 = vmatpush1.msra.mxu0 %v779
      %922 = vmatprep.subr.mxu0 0.0
      %923 = vmatpush1.msra.mxu0 %v780
      %924 = vmatprep.subr.mxu0 0.0
      %925 = vmatpush1.msra.mxu0 %v781
      %926 = vmatprep.subr.mxu0 0.0
      %927 = vmatpush1.msra.mxu0 %v782
      %928 = vmatprep.subr.mxu0 0.0
      %929 = vmatpush1.msra.mxu0 %v783
      %930 = vmatprep.subr.mxu0 0.0
      %931 = vmatpush1.msra.mxu0 %v784
      %932 = vmatprep.subr.mxu0 0.0
      %933 = vmatpush1.msra.mxu0 %v785
      %934 = vmatprep.subr.mxu0 0.0
      %935 = vmatpush1.msra.mxu0 %v786
      %936 = vmatprep.subr.mxu0 0.0
      %937 = vmatpush1.msra.mxu0 %v787
      %938 = vmatprep.subr.mxu0 0.0
      %939 = vmatpush1.msra.mxu0 %v788
      %940 = vmatprep.subr.mxu0 0.0
      %941 = vmatpush1.msra.mxu0 %v789
      %942 = vmatprep.subr.mxu0 0.0
      %943 = vmatpush1.msra.mxu0 %v790
      %944 = vmatprep.subr.mxu0 0.0
      %945 = vmatpush1.msra.mxu0 %v791
      %946 = vmatprep.subr.mxu0 0.0
      %947 = vmatpush1.msra.mxu0 %v792
      %948 = vmatprep.subr.mxu0 0.0
      %949 = vmatpush1.msra.mxu0 %v793
      %950 = vmatprep.subr.mxu0 0.0
      %951 = vmatpush1.msra.mxu0 %v794
      %952 = vmatprep.mubr.f32.mxu0 %v856
      %953 = vmatmul.mubr.f32.gmra.mrb[0].mxu0 %v853
      %v954 = vpop.f32.mrb[0].mxu0
      %v955 = vadd.f32 0.0, %v954
      %v956 = vpop.f32.mrb[0].mxu0
      %957 = vmatprep.mubr.f32.mxu0 %v869
      %958 = vmatmul.mubr.f32.gmra.mrb[0].mxu0 %v867
      %v959 = vpop.f32.mrb[0].mxu0
      %v960 = vadd.f32 0.0, %v959
      %v961 = vpop.f32.mrb[0].mxu0
      %962 = vdwg.mxu0
      %963 = vmatprep.subr.mxu0 0.0
      %964 = vmatpush1.msra.mxu0 %v795
      %965 = vmatprep.subr.mxu0 0.0
      %966 = vmatpush1.msra.mxu0 %v796
      %967 = vmatprep.subr.mxu0 0.0
      %968 = vmatpush1.msra.mxu0 %v797
      %969 = vmatprep.subr.mxu0 0.0
      %970 = vmatpush1.msra.mxu0 %v798
      %971 = vmatprep.subr.mxu0 0.0
      %972 = vmatpush1.msra.mxu0 %v799
      %973 = vmatprep.subr.mxu0 0.0
      %974 = vmatpush1.msra.mxu0 %v800
      %975 = vmatprep.subr.mxu0 0.0
      %976 = vmatpush1.msra.mxu0 %v801
      %977 = vmatprep.subr.mxu0 0.0
      %978 = vmatpush1.msra.mxu0 %v802
      %979 = vmatprep.subr.mxu0 0.0
      %980 = vmatpush1.msra.mxu0 %v803
      %981 = vmatprep.subr.mxu0 0.0
      %982 = vmatpush1.msra.mxu0 %v804
      %983 = vmatprep.subr.mxu0 0.0
      %984 = vmatpush1.msra.mxu0 %v805
      %985 = vmatprep.subr.mxu0 0.0
      %986 = vmatpush1.msra.mxu0 %v806
      %987 = vmatprep.subr.mxu0 0.0
      %988 = vmatpush1.msra.mxu0 %v807
      %989 = vmatprep.subr.mxu0 0.0
      %990 = vmatpush1.msra.mxu0 %v808
      %991 = vmatprep.subr.mxu0 0.0
      %992 = vmatpush1.msra.mxu0 %v809
      %993 = vmatprep.subr.mxu0 0.0
      %994 = vmatpush1.msra.mxu0 %v810
      %995 = vmatprep.subr.mxu0 0.0
      %996 = vmatpush1.msra.mxu0 %v811
      %997 = vmatprep.subr.mxu0 0.0
      %998 = vmatpush1.msra.mxu0 %v812
      %999 = vmatprep.subr.mxu0 0.0
      %1000 = vmatpush1.msra.mxu0 %v813
      %1001 = vmatprep.subr.mxu0 0.0
      %1002 = vmatpush1.msra.mxu0 %v814
      %1003 = vmatprep.subr.mxu0 0.0
      %1004 = vmatpush1.msra.mxu0 %v815
      %1005 = vmatprep.subr.mxu0 0.0
      %1006 = vmatpush1.msra.mxu0 %v816
      %1007 = vmatprep.subr.mxu0 0.0
      %1008 = vmatpush1.msra.mxu0 %v817
      %1009 = vmatprep.subr.mxu0 0.0
      %1010 = vmatpush1.msra.mxu0 %v818
      %1011 = vmatprep.subr.mxu0 0.0
      %1012 = vmatpush1.msra.mxu0 %v819
      %1013 = vmatprep.subr.mxu0 0.0
      %1014 = vmatpush1.msra.mxu0 %v820
      %1015 = vmatprep.subr.mxu0 0.0
      %1016 = vmatpush1.msra.mxu0 %v821
      %1017 = vmatprep.subr.mxu0 0.0
      %1018 = vmatpush1.msra.mxu0 %v822
      %1019 = vmatprep.subr.mxu0 0.0
      %1020 = vmatpush1.msra.mxu0 %v823
      %1021 = vmatprep.subr.mxu0 0.0
      %1022 = vmatpush1.msra.mxu0 %v824
      %1023 = vmatprep.subr.mxu0 0.0
      %1024 = vmatpush1.msra.mxu0 %v825
      %1025 = vmatprep.subr.mxu0 0.0
      %1026 = vmatpush1.msra.mxu0 %v826
      %1027 = vmatprep.mubr.f32.mxu0 %v862
      %1028 = vmatmul.mubr.f32.gmra.mrb[0].mxu0 %v859
      %v1029 = vpop.f32.mrb[0].mxu0
      %v1030 = vadd.f32 %v955, %v1029
      %v1031 = vpop.f32.mrb[0].mxu0
      %1032 = vmatprep.mubr.f32.mxu0 %v873
      %1033 = vmatmul.mubr.f32.gmra.mrb[0].mxu0 %v871
      %v1034 = vpop.f32.mrb[0].mxu0
      %v1035 = vadd.f32 %v960, %v1034
      %v1036 = vpop.f32.mrb[0].mxu0
      %1037 = vdwg.mxu0
      %1038 = vmatprep.subr.mxu0 0.0
      %1039 = vmatpush1.msra.mxu0 %v827
      %1040 = vmatprep.subr.mxu0 0.0
      %1041 = vmatpush1.msra.mxu0 %v828
      %1042 = vmatprep.subr.mxu0 0.0
      %1043 = vmatpush1.msra.mxu0 %v829
      %1044 = vmatprep.subr.mxu0 0.0
      %1045 = vmatpush1.msra.mxu0 %v830
      %1046 = vmatprep.subr.mxu0 0.0
      %1047 = vmatpush1.msra.mxu0 %v831
      %1048 = vmatprep.subr.mxu0 0.0
      %1049 = vmatpush1.msra.mxu0 %v832
      %1050 = vmatprep.subr.mxu0 0.0
      %1051 = vmatpush1.msra.mxu0 %v833
      %1052 = vmatprep.subr.mxu0 0.0
      %1053 = vmatpush1.msra.mxu0 %v834
      %1054 = vmatprep.subr.mxu0 0.0
      %1055 = vmatpush1.msra.mxu0 0.0
      %1056 = vmatprep.subr.mxu0 0.0
      %1057 = vmatpush1.msra.mxu0 0.0
      %1058 = vmatprep.subr.mxu0 0.0
      %1059 = vmatpush1.msra.mxu0 0.0
      %1060 = vmatprep.subr.mxu0 0.0
      %1061 = vmatpush1.msra.mxu0 0.0
      %1062 = vmatprep.subr.mxu0 0.0
      %1063 = vmatpush1.msra.mxu0 0.0
      %1064 = vmatprep.subr.mxu0 0.0
      %1065 = vmatpush1.msra.mxu0 0.0
      %1066 = vmatprep.subr.mxu0 0.0
      %1067 = vmatpush1.msra.mxu0 0.0
      %1068 = vmatprep.subr.mxu0 0.0
      %1069 = vmatpush1.msra.mxu0 0.0
      %1070 = vmatprep.subr.mxu0 0.0
      %1071 = vmatpush1.msra.mxu0 0.0
      %1072 = vmatprep.subr.mxu0 0.0
      %1073 = vmatpush1.msra.mxu0 0.0
      %1074 = vmatprep.subr.mxu0 0.0
      %1075 = vmatpush1.msra.mxu0 0.0
      %1076 = vmatprep.subr.mxu0 0.0
      %1077 = vmatpush1.msra.mxu0 0.0
      %1078 = vmatprep.subr.mxu0 0.0
      %1079 = vmatpush1.msra.mxu0 0.0
      %1080 = vmatprep.subr.mxu0 0.0
      %1081 = vmatpush1.msra.mxu0 0.0
      %1082 = vmatprep.subr.mxu0 0.0
      %1083 = vmatpush1.msra.mxu0 0.0
      %1084 = vmatprep.subr.mxu0 0.0
      %1085 = vmatpush1.msra.mxu0 0.0
      %1086 = vmatprep.subr.mxu0 0.0
      %1087 = vmatpush1.msra.mxu0 0.0
      %1088 = vmatprep.subr.mxu0 0.0
      %1089 = vmatpush1.msra.mxu0 0.0
      %1090 = vmatprep.subr.mxu0 0.0
      %1091 = vmatpush1.msra.mxu0 0.0
      %1092 = vmatprep.subr.mxu0 0.0
      %1093 = vmatpush1.msra.mxu0 0.0
      %1094 = vmatprep.subr.mxu0 0.0
      %1095 = vmatpush1.msra.mxu0 0.0
      %1096 = vmatprep.subr.mxu0 0.0
      %1097 = vmatpush1.msra.mxu0 0.0
      %1098 = vmatprep.subr.mxu0 0.0
      %1099 = vmatpush1.msra.mxu0 0.0
      %1100 = vmatprep.subr.mxu0 0.0
      %1101 = vmatpush1.msra.mxu0 0.0
      %1102 = vmatprep.mubr.f32.mxu0 0.0
      %1103 = vmatmul.mubr.f32.gmra.mrb[0].mxu0 %v884
      %v1104 = vpop.f32.mrb[0].mxu0
      %v1105 = vadd.f32 %v1030, %v1104
      %v1106 = vpop.f32.mrb[0].mxu0
      %1107 = vmatprep.mubr.f32.mxu0 0.0
      %1108 = vmatmul.mubr.f32.gmra.mrb[0].mxu0 %v886
      %v1109 = vpop.f32.mrb[0].mxu0
      %v1110 = vadd.f32 %v1035, %v1109
      %v1111 = vpop.f32.mrb[0].mxu0
      %1112 = vdwg.mxu0
      %v1114 = vsel %vm352, %v674, 0
      %v1116 = vsel %vm352, %v679, 0
      %1118 = vmatprep.subr.mxu0 0.0
      %1119 = vmatpush1.msra.mxu0 %v680
      %1120 = vmatprep.subr.mxu0 0.0
      %1121 = vmatpush1.msra.mxu0 %v681
      %1122 = vmatprep.subr.mxu0 0.0
      %1123 = vmatpush1.msra.mxu0 %v682
      %1124 = vmatprep.subr.mxu0 0.0
      %1125 = vmatpush1.msra.mxu0 %v683
      %1126 = vmatprep.subr.mxu0 0.0
      %1127 = vmatpush1.msra.mxu0 %v684
      %1128 = vmatprep.subr.mxu0 0.0
      %1129 = vmatpush1.msra.mxu0 %v685
      %1130 = vmatprep.subr.mxu0 0.0
      %1131 = vmatpush1.msra.mxu0 %v686
      %1132 = vmatprep.subr.mxu0 0.0
      %1133 = vmatpush1.msra.mxu0 %v687
      %1134 = vmatprep.subr.mxu0 0.0
      %1135 = vmatpush1.msra.mxu0 %v688
      %1136 = vmatprep.subr.mxu0 0.0
      %1137 = vmatpush1.msra.mxu0 %v689
      %1138 = vmatprep.subr.mxu0 0.0
      %1139 = vmatpush1.msra.mxu0 %v690
      %1140 = vmatprep.subr.mxu0 0.0
      %1141 = vmatpush1.msra.mxu0 %v691
      %1142 = vmatprep.subr.mxu0 0.0
      %1143 = vmatpush1.msra.mxu0 %v692
      %1144 = vmatprep.subr.mxu0 0.0
      %1145 = vmatpush1.msra.mxu0 %v693
      %1146 = vmatprep.subr.mxu0 0.0
      %1147 = vmatpush1.msra.mxu0 %v694
      %1148 = vmatprep.subr.mxu0 0.0
      %1149 = vmatpush1.msra.mxu0 %v695
      %1150 = vmatprep.subr.mxu0 0.0
      %1151 = vmatpush1.msra.mxu0 %v696
      %1152 = vmatprep.subr.mxu0 0.0
      %1153 = vmatpush1.msra.mxu0 %v697
      %1154 = vmatprep.subr.mxu0 0.0
      %1155 = vmatpush1.msra.mxu0 %v698
      %1156 = vmatprep.subr.mxu0 0.0
      %1157 = vmatpush1.msra.mxu0 %v699
      %1158 = vmatprep.subr.mxu0 0.0
      %1159 = vmatpush1.msra.mxu0 %v700
      %1160 = vmatprep.subr.mxu0 0.0
      %1161 = vmatpush1.msra.mxu0 %v701
      %1162 = vmatprep.subr.mxu0 0.0
      %1163 = vmatpush1.msra.mxu0 %v702
      %1164 = vmatprep.subr.mxu0 0.0
      %1165 = vmatpush1.msra.mxu0 %v703
      %1166 = vmatprep.subr.mxu0 0.0
      %1167 = vmatpush1.msra.mxu0 %v704
      %1168 = vmatprep.subr.mxu0 0.0
      %1169 = vmatpush1.msra.mxu0 %v705
      %1170 = vmatprep.subr.mxu0 0.0
      %1171 = vmatpush1.msra.mxu0 %v706
      %1172 = vmatprep.subr.mxu0 0.0
      %1173 = vmatpush1.msra.mxu0 %v707
      %1174 = vmatprep.subr.mxu0 0.0
      %1175 = vmatpush1.msra.mxu0 %v708
      %1176 = vmatprep.subr.mxu0 0.0
      %1177 = vmatpush1.msra.mxu0 %v709
      %1178 = vmatprep.subr.mxu0 0.0
      %1179 = vmatpush1.msra.mxu0 %v710
      %1180 = vmatprep.subr.mxu0 0.0
      %1181 = vmatpush1.msra.mxu0 %v711
      %1182 = vmatprep.mubr.f32.mxu0 %v671
      %1183 = vmatmul.mubr.f32.gmra.mrb[0].mxu0 %v670
      %v1184 = vpop.f32.mrb[0].mxu0
      %v1185 = vadd.f32 %v1105, %v1184
      %v1186 = vpop.f32.mrb[0].mxu0
      %1187 = vmatprep.mubr.f32.mxu0 %v676
      %1188 = vmatmul.mubr.f32.gmra.mrb[0].mxu0 %v675
      %v1189 = vpop.f32.mrb[0].mxu0
      %v1190 = vadd.f32 %v1110, %v1189
      %v1191 = vpop.f32.mrb[0].mxu0
      %1192 = vdwg.mxu0
      %1193 = vmatprep.subr.mxu0 0.0
      %1194 = vmatpush1.msra.mxu0 %v712
      %1195 = vmatprep.subr.mxu0 0.0
      %1196 = vmatpush1.msra.mxu0 %v713
      %1197 = vmatprep.subr.mxu0 0.0
      %1198 = vmatpush1.msra.mxu0 %v714
      %1199 = vmatprep.subr.mxu0 0.0
      %1200 = vmatpush1.msra.mxu0 %v715
      %1201 = vmatprep.subr.mxu0 0.0
      %1202 = vmatpush1.msra.mxu0 %v716
      %1203 = vmatprep.subr.mxu0 0.0
      %1204 = vmatpush1.msra.mxu0 %v717
      %1205 = vmatprep.subr.mxu0 0.0
      %1206 = vmatpush1.msra.mxu0 %v718
      %1207 = vmatprep.subr.mxu0 0.0
      %1208 = vmatpush1.msra.mxu0 %v719
      %1209 = vmatprep.subr.mxu0 0.0
      %1210 = vmatpush1.msra.mxu0 %v720
      %1211 = vmatprep.subr.mxu0 0.0
      %1212 = vmatpush1.msra.mxu0 %v721
      %1213 = vmatprep.subr.mxu0 0.0
      %1214 = vmatpush1.msra.mxu0 %v722
      %1215 = vmatprep.subr.mxu0 0.0
      %1216 = vmatpush1.msra.mxu0 %v723
      %1217 = vmatprep.subr.mxu0 0.0
      %1218 = vmatpush1.msra.mxu0 %v724
      %1219 = vmatprep.subr.mxu0 0.0
      %1220 = vmatpush1.msra.mxu0 %v725
      %1221 = vmatprep.subr.mxu0 0.0
      %1222 = vmatpush1.msra.mxu0 %v726
      %1223 = vmatprep.subr.mxu0 0.0
      %1224 = vmatpush1.msra.mxu0 %v727
      %1225 = vmatprep.subr.mxu0 0.0
      %1226 = vmatpush1.msra.mxu0 %v728
      %1227 = vmatprep.subr.mxu0 0.0
      %1228 = vmatpush1.msra.mxu0 %v729
      %1229 = vmatprep.subr.mxu0 0.0
      %1230 = vmatpush1.msra.mxu0 %v730
      %1231 = vmatprep.subr.mxu0 0.0
      %1232 = vmatpush1.msra.mxu0 %v731
      %1233 = vmatprep.subr.mxu0 0.0
      %1234 = vmatpush1.msra.mxu0 %v732
      %1235 = vmatprep.subr.mxu0 0.0
      %1236 = vmatpush1.msra.mxu0 %v733
      %1237 = vmatprep.subr.mxu0 0.0
      %1238 = vmatpush1.msra.mxu0 %v734
      %1239 = vmatprep.subr.mxu0 0.0
      %1240 = vmatpush1.msra.mxu0 %v735
      %1241 = vmatprep.subr.mxu0 0.0
      %1242 = vmatpush1.msra.mxu0 %v736
      %1243 = vmatprep.subr.mxu0 0.0
      %1244 = vmatpush1.msra.mxu0 %v737
      %1245 = vmatprep.subr.mxu0 0.0
      %1246 = vmatpush1.msra.mxu0 %v738
      %1247 = vmatprep.subr.mxu0 0.0
      %1248 = vmatpush1.msra.mxu0 %v739
      %1249 = vmatprep.subr.mxu0 0.0
      %1250 = vmatpush1.msra.mxu0 %v740
      %1251 = vmatprep.subr.mxu0 0.0
      %1252 = vmatpush1.msra.mxu0 %v741
      %1253 = vmatprep.subr.mxu0 0.0
      %1254 = vmatpush1.msra.mxu0 %v742
      %1255 = vmatprep.subr.mxu0 0.0
      %1256 = vmatpush1.msra.mxu0 %v743
      %1257 = vmatprep.mubr.f32.mxu0 %v673
      %1258 = vmatmul.mubr.f32.gmra.mrb[0].mxu0 %v672
      %v1259 = vpop.f32.mrb[0].mxu0
      %v1260 = vadd.f32 %v1185, %v1259
      %v1261 = vpop.f32.mrb[0].mxu0
      %1262 = vmatprep.mubr.f32.mxu0 %v678
      %1263 = vmatmul.mubr.f32.gmra.mrb[0].mxu0 %v677
      %v1264 = vpop.f32.mrb[0].mxu0
      %v1265 = vadd.f32 %v1190, %v1264
      %v1266 = vpop.f32.mrb[0].mxu0
      %1267 = vdwg.mxu0
      %1268 = vmatprep.subr.mxu0 0.0
      %1269 = vmatpush1.msra.mxu0 %v744
      %1270 = vmatprep.subr.mxu0 0.0
      %1271 = vmatpush1.msra.mxu0 %v745
      %1272 = vmatprep.subr.mxu0 0.0
      %1273 = vmatpush1.msra.mxu0 %v746
      %1274 = vmatprep.subr.mxu0 0.0
      %1275 = vmatpush1.msra.mxu0 %v747
      %1276 = vmatprep.subr.mxu0 0.0
      %1277 = vmatpush1.msra.mxu0 %v748
      %1278 = vmatprep.subr.mxu0 0.0
      %1279 = vmatpush1.msra.mxu0 %v749
      %1280 = vmatprep.subr.mxu0 0.0
      %1281 = vmatpush1.msra.mxu0 %v750
      %1282 = vmatprep.subr.mxu0 0.0
      %1283 = vmatpush1.msra.mxu0 %v751
      %1284 = vmatprep.subr.mxu0 0.0
      %1285 = vmatpush1.msra.mxu0 0.0
      %1286 = vmatprep.subr.mxu0 0.0
      %1287 = vmatpush1.msra.mxu0 0.0
      %1288 = vmatprep.subr.mxu0 0.0
      %1289 = vmatpush1.msra.mxu0 0.0
      %1290 = vmatprep.subr.mxu0 0.0
      %1291 = vmatpush1.msra.mxu0 0.0
      %1292 = vmatprep.subr.mxu0 0.0
      %1293 = vmatpush1.msra.mxu0 0.0
      %1294 = vmatprep.subr.mxu0 0.0
      %1295 = vmatpush1.msra.mxu0 0.0
      %1296 = vmatprep.subr.mxu0 0.0
      %1297 = vmatpush1.msra.mxu0 0.0
      %1298 = vmatprep.subr.mxu0 0.0
      %1299 = vmatpush1.msra.mxu0 0.0
      %1300 = vmatprep.subr.mxu0 0.0
      %1301 = vmatpush1.msra.mxu0 0.0
      %1302 = vmatprep.subr.mxu0 0.0
      %1303 = vmatpush1.msra.mxu0 0.0
      %1304 = vmatprep.subr.mxu0 0.0
      %1305 = vmatpush1.msra.mxu0 0.0
      %1306 = vmatprep.subr.mxu0 0.0
      %1307 = vmatpush1.msra.mxu0 0.0
      %1308 = vmatprep.subr.mxu0 0.0
      %1309 = vmatpush1.msra.mxu0 0.0
      %1310 = vmatprep.subr.mxu0 0.0
      %1311 = vmatpush1.msra.mxu0 0.0
      %1312 = vmatprep.subr.mxu0 0.0
      %1313 = vmatpush1.msra.mxu0 0.0
      %1314 = vmatprep.subr.mxu0 0.0
      %1315 = vmatpush1.msra.mxu0 0.0
      %1316 = vmatprep.subr.mxu0 0.0
      %1317 = vmatpush1.msra.mxu0 0.0
      %1318 = vmatprep.subr.mxu0 0.0
      %1319 = vmatpush1.msra.mxu0 0.0
      %1320 = vmatprep.subr.mxu0 0.0
      %1321 = vmatpush1.msra.mxu0 0.0
      %1322 = vmatprep.subr.mxu0 0.0
      %1323 = vmatpush1.msra.mxu0 0.0
      %1324 = vmatprep.subr.mxu0 0.0
      %1325 = vmatpush1.msra.mxu0 0.0
      %1326 = vmatprep.subr.mxu0 0.0
      %1327 = vmatpush1.msra.mxu0 0.0
      %1328 = vmatprep.subr.mxu0 0.0
      %1329 = vmatpush1.msra.mxu0 0.0
      %1330 = vmatprep.subr.mxu0 0.0
      %1331 = vmatpush1.msra.mxu0 0.0
      %1332 = vmatprep.mubr.f32.mxu0 0.0
      %1333 = vmatmul.mubr.f32.gmra.mrb[0].mxu0 %v1114
      %v1334 = vpop.f32.mrb[0].mxu0
      %v1335 = vadd.f32 %v1260, %v1334
      %v1336 = vpop.f32.mrb[0].mxu0
      %1337 = vmatprep.mubr.f32.mxu0 0.0
      %1338 = vmatmul.mubr.f32.gmra.mrb[0].mxu0 %v1116
      %v1339 = vpop.f32.mrb[0].mxu0
      %v1340 = vadd.f32 %v1265, %v1339
      %v1341 = vpop.f32.mrb[0].mxu0
      %1342 = vdwg.mxu0
      %v1343 = vld [vmem:[#allocation2] sm:$0xfc]
      %v1344 = vld [vmem:[#allocation2 + $0x8] sm:$0xfc]
      %v1345 = vld [vmem:[#allocation2 + $0x10] sm:$0xfc]
      %v1346 = vld [vmem:[#allocation2 + $0x18] sm:$0xfc]
      %v1347 = vld [vmem:[#allocation2 + $0x20] sm:$0xfc]
      %v1348 = vld [vmem:[#allocation2 + $0x50] sm:$0x3]
      %v1349 = vld [vmem:[#allocation2 + $0x58] sm:$0x3]
      %v1350 = vld [vmem:[#allocation2 + $0x60] sm:$0x3]
      %v1351 = vld [vmem:[#allocation2 + $0x68] sm:$0x3]
      %v1352 = vld [vmem:[#allocation2 + $0x70] sm:$0x3]
      %s1353 = scalar_lea.vmem %s6, 1152
      %v1354 = vld [vmem:[%s1353] sm:$0xff]
      %v1355 = vld [vmem:[%s1353 + $0x8] sm:$0xff]
      %v1356 = vld [vmem:[%s1353 + $0x10] sm:$0xff]
      %v1357 = vld [vmem:[%s1353 + $0x18] sm:$0xff]
      %v1358 = vld [vmem:[%s1353 + $0x20] sm:$0xff]
      %v1359 = vld [vmem:[%s1353 + $0x28] sm:$0xff]
      %v1360 = vld [vmem:[%s1353 + $0x30] sm:$0xff]
      %v1361 = vld [vmem:[%s1353 + $0x38] sm:$0xff]
      %v1362 = vld [vmem:[%s1353 + $0x40] sm:$0xff]
      %v1363 = vld [vmem:[%s1353 + $0x48] sm:$0xff]
      %v1364 = vld [vmem:[%s1353 + $0x50] sm:$0xff]
      %v1365 = vld [vmem:[%s1353 + $0x58] sm:$0xff]
      %v1366 = vld [vmem:[%s1353 + $0x60] sm:$0xff]
      %v1367 = vld [vmem:[%s1353 + $0x68] sm:$0xff]
      %v1368 = vld [vmem:[%s1353 + $0x70] sm:$0xff]
      %v1369 = vld [vmem:[%s1353 + $0x78] sm:$0xff]
      %v1370 = vld [vmem:[%s1353 + $0x80] sm:$0xff]
      %v1371 = vld [vmem:[%s1353 + $0x88] sm:$0xff]
      %v1372 = vld [vmem:[%s1353 + $0x90] sm:$0xff]
      %v1373 = vld [vmem:[%s1353 + $0x98] sm:$0xff]
      %v1374 = vld [vmem:[%s1353 + $0xa0] sm:$0xff]
      %v1375 = vld [vmem:[%s1353 + $0xa8] sm:$0xff]
      %v1376 = vld [vmem:[%s1353 + $0xb0] sm:$0xff]
      %v1377 = vld [vmem:[%s1353 + $0xb8] sm:$0xff]
      %v1378 = vld [vmem:[%s1353 + $0xc0] sm:$0xff]
      %v1379 = vld [vmem:[%s1353 + $0xc8] sm:$0xff]
      %v1380 = vld [vmem:[%s1353 + $0xd0] sm:$0xff]
      %v1381 = vld [vmem:[%s1353 + $0xd8] sm:$0xff]
      %v1382 = vld [vmem:[%s1353 + $0xe0] sm:$0xff]
      %v1383 = vld [vmem:[%s1353 + $0xe8] sm:$0xff]
      %v1384 = vld [vmem:[%s1353 + $0xf0] sm:$0xff]
      %v1385 = vld [vmem:[%s1353 + $0xf8] sm:$0xff]
      %v1386 = vld [vmem:[%s1353 + $0x100] sm:$0xff]
      %v1387 = vld [vmem:[%s1353 + $0x108] sm:$0xff]
      %v1388 = vld [vmem:[%s1353 + $0x110] sm:$0xff]
      %v1389 = vld [vmem:[%s1353 + $0x118] sm:$0xff]
      %v1390 = vld [vmem:[%s1353 + $0x120] sm:$0xff]
      %v1391 = vld [vmem:[%s1353 + $0x128] sm:$0xff]
      %v1392 = vld [vmem:[%s1353 + $0x130] sm:$0xff]
      %v1393 = vld [vmem:[%s1353 + $0x138] sm:$0xff]
      %v1394 = vld [vmem:[%s1353 + $0x140] sm:$0xff]
      %v1395 = vld [vmem:[%s1353 + $0x148] sm:$0xff]
      %v1396 = vld [vmem:[%s1353 + $0x150] sm:$0xff]
      %v1397 = vld [vmem:[%s1353 + $0x158] sm:$0xff]
      %v1398 = vld [vmem:[%s1353 + $0x160] sm:$0xff]
      %v1399 = vld [vmem:[%s1353 + $0x168] sm:$0xff]
      %v1400 = vld [vmem:[%s1353 + $0x170] sm:$0xff]
      %v1401 = vld [vmem:[%s1353 + $0x178] sm:$0xff]
      %v1402 = vld [vmem:[%s1353 + $0x180] sm:$0xff]
      %v1403 = vld [vmem:[%s1353 + $0x188] sm:$0xff]
      %v1404 = vld [vmem:[%s1353 + $0x190] sm:$0xff]
      %v1405 = vld [vmem:[%s1353 + $0x198] sm:$0xff]
      %v1406 = vld [vmem:[%s1353 + $0x1a0] sm:$0xff]
      %v1407 = vld [vmem:[%s1353 + $0x1a8] sm:$0xff]
      %v1408 = vld [vmem:[%s1353 + $0x1b0] sm:$0xff]
      %v1409 = vld [vmem:[%s1353 + $0x1b8] sm:$0xff]
      %v1410 = vld [vmem:[%s1353 + $0x1c0] sm:$0xff]
      %v1411 = vld [vmem:[%s1353 + $0x1c8] sm:$0xff]
      %v1412 = vld [vmem:[%s1353 + $0x1d0] sm:$0xff]
      %v1413 = vld [vmem:[%s1353 + $0x1d8] sm:$0xff]
      %v1414 = vld [vmem:[%s1353 + $0x1e0] sm:$0xff]
      %v1415 = vld [vmem:[%s1353 + $0x1e8] sm:$0xff]
      %v1416 = vld [vmem:[%s1353 + $0x1f0] sm:$0xff]
      %v1417 = vld [vmem:[%s1353 + $0x1f8] sm:$0xff]
      %v1418 = vld [vmem:[%s1353 + $0x200] sm:$0xff]
      %v1419 = vld [vmem:[%s1353 + $0x208] sm:$0xff]
      %v1420 = vld [vmem:[%s1353 + $0x210] sm:$0xff]
      %v1421 = vld [vmem:[%s1353 + $0x218] sm:$0xff]
      %v1422 = vld [vmem:[%s1353 + $0x220] sm:$0xff]
      %v1423 = vld [vmem:[%s1353 + $0x228] sm:$0xff]
      %v1424 = vld [vmem:[%s1353 + $0x230] sm:$0xff]
      %v1425 = vld [vmem:[%s1353 + $0x238] sm:$0xff]
      %vm1436 = vcmask 1045504
      %v1437 = vrot.slane %v1343, 2
      %v1438 = vrot.slane %v675, 2
      %v1439 = vsel %vm1436, %v1437, %v1438
      %v1440 = vrot.slane %v1344, 2
      %v1441 = vrot.slane %v676, 2
      %v1442 = vsel %vm1436, %v1440, %v1441
      %v1443 = vrot.slane %v1345, 2
      %v1444 = vrot.slane %v677, 2
      %v1445 = vsel %vm1436, %v1443, %v1444
      %v1446 = vrot.slane %v1346, 2
      %v1447 = vrot.slane %v678, 2
      %v1448 = vsel %vm1436, %v1446, %v1447
      %v1449 = vrot.slane %v1347, 2
      %v1450 = vrot.slane %v679, 2
      %v1451 = vsel %vm1436, %v1449, %v1450
      %v1452 = vrot.slane %v1348, 2
      %v1453 = vsel %vm1436, %v1438, %v1452
      %v1454 = vrot.slane %v1349, 2
      %v1455 = vsel %vm1436, %v1441, %v1454
      %v1456 = vrot.slane %v1350, 2
      %v1457 = vsel %vm1436, %v1444, %v1456
      %v1458 = vrot.slane %v1351, 2
      %v1459 = vsel %vm1436, %v1447, %v1458
      %v1460 = vrot.slane %v1352, 2
      %v1461 = vsel %vm1436, %v1450, %v1460
      %v1470 = vsel %vm352, %v1451, 0
      %v1472 = vsel %vm352, %v1461, 0
      %1474 = vmatprep.subr.mxu0 0.0
      %1475 = vmatpush1.msra.mxu0 %v1354
      %1476 = vmatprep.subr.mxu0 0.0
      %1477 = vmatpush1.msra.mxu0 %v1355
      %1478 = vmatprep.subr.mxu0 0.0
      %1479 = vmatpush1.msra.mxu0 %v1356
      %1480 = vmatprep.subr.mxu0 0.0
      %1481 = vmatpush1.msra.mxu0 %v1357
      %1482 = vmatprep.subr.mxu0 0.0
      %1483 = vmatpush1.msra.mxu0 %v1358
      %1484 = vmatprep.subr.mxu0 0.0
      %1485 = vmatpush1.msra.mxu0 %v1359
      %1486 = vmatprep.subr.mxu0 0.0
      %1487 = vmatpush1.msra.mxu0 %v1360
      %1488 = vmatprep.subr.mxu0 0.0
      %1489 = vmatpush1.msra.mxu0 %v1361
      %1490 = vmatprep.subr.mxu0 0.0
      %1491 = vmatpush1.msra.mxu0 %v1362
      %1492 = vmatprep.subr.mxu0 0.0
      %1493 = vmatpush1.msra.mxu0 %v1363
      %1494 = vmatprep.subr.mxu0 0.0
      %1495 = vmatpush1.msra.mxu0 %v1364
      %1496 = vmatprep.subr.mxu0 0.0
      %1497 = vmatpush1.msra.mxu0 %v1365
      %1498 = vmatprep.subr.mxu0 0.0
      %1499 = vmatpush1.msra.mxu0 %v1366
      %1500 = vmatprep.subr.mxu0 0.0
      %1501 = vmatpush1.msra.mxu0 %v1367
      %1502 = vmatprep.subr.mxu0 0.0
      %1503 = vmatpush1.msra.mxu0 %v1368
      %1504 = vmatprep.subr.mxu0 0.0
      %1505 = vmatpush1.msra.mxu0 %v1369
      %1506 = vmatprep.subr.mxu0 0.0
      %1507 = vmatpush1.msra.mxu0 %v1370
      %1508 = vmatprep.subr.mxu0 0.0
      %1509 = vmatpush1.msra.mxu0 %v1371
      %1510 = vmatprep.subr.mxu0 0.0
      %1511 = vmatpush1.msra.mxu0 %v1372
      %1512 = vmatprep.subr.mxu0 0.0
      %1513 = vmatpush1.msra.mxu0 %v1373
      %1514 = vmatprep.subr.mxu0 0.0
      %1515 = vmatpush1.msra.mxu0 %v1374
      %1516 = vmatprep.subr.mxu0 0.0
      %1517 = vmatpush1.msra.mxu0 %v1375
      %1518 = vmatprep.subr.mxu0 0.0
      %1519 = vmatpush1.msra.mxu0 %v1376
      %1520 = vmatprep.subr.mxu0 0.0
      %1521 = vmatpush1.msra.mxu0 %v1377
      %1522 = vmatprep.subr.mxu0 0.0
      %1523 = vmatpush1.msra.mxu0 %v1378
      %1524 = vmatprep.subr.mxu0 0.0
      %1525 = vmatpush1.msra.mxu0 %v1379
      %1526 = vmatprep.subr.mxu0 0.0
      %1527 = vmatpush1.msra.mxu0 %v1380
      %1528 = vmatprep.subr.mxu0 0.0
      %1529 = vmatpush1.msra.mxu0 %v1381
      %1530 = vmatprep.subr.mxu0 0.0
      %1531 = vmatpush1.msra.mxu0 %v1382
      %1532 = vmatprep.subr.mxu0 0.0
      %1533 = vmatpush1.msra.mxu0 %v1383
      %1534 = vmatprep.subr.mxu0 0.0
      %1535 = vmatpush1.msra.mxu0 %v1384
      %1536 = vmatprep.subr.mxu0 0.0
      %1537 = vmatpush1.msra.mxu0 %v1385
      %1538 = vmatprep.mubr.f32.mxu0 %v1442
      %1539 = vmatmul.mubr.f32.gmra.mrb[0].mxu0 %v1439
      %v1540 = vpop.f32.mrb[0].mxu0
      %v1541 = vadd.f32 0.0, %v1540
      %v1542 = vpop.f32.mrb[0].mxu0
      %1543 = vmatprep.mubr.f32.mxu0 %v1455
      %1544 = vmatmul.mubr.f32.gmra.mrb[0].mxu0 %v1453
      %v1545 = vpop.f32.mrb[0].mxu0
      %v1546 = vadd.f32 0.0, %v1545
      %v1547 = vpop.f32.mrb[0].mxu0
      %1548 = vdwg.mxu0
      %1549 = vmatprep.subr.mxu0 0.0
      %1550 = vmatpush1.msra.mxu0 %v1386
      %1551 = vmatprep.subr.mxu0 0.0
      %1552 = vmatpush1.msra.mxu0 %v1387
      %1553 = vmatprep.subr.mxu0 0.0
      %1554 = vmatpush1.msra.mxu0 %v1388
      %1555 = vmatprep.subr.mxu0 0.0
      %1556 = vmatpush1.msra.mxu0 %v1389
      %1557 = vmatprep.subr.mxu0 0.0
      %1558 = vmatpush1.msra.mxu0 %v1390
      %1559 = vmatprep.subr.mxu0 0.0
      %1560 = vmatpush1.msra.mxu0 %v1391
      %1561 = vmatprep.subr.mxu0 0.0
      %1562 = vmatpush1.msra.mxu0 %v1392
      %1563 = vmatprep.subr.mxu0 0.0
      %1564 = vmatpush1.msra.mxu0 %v1393
      %1565 = vmatprep.subr.mxu0 0.0
      %1566 = vmatpush1.msra.mxu0 %v1394
      %1567 = vmatprep.subr.mxu0 0.0
      %1568 = vmatpush1.msra.mxu0 %v1395
      %1569 = vmatprep.subr.mxu0 0.0
      %1570 = vmatpush1.msra.mxu0 %v1396
      %1571 = vmatprep.subr.mxu0 0.0
      %1572 = vmatpush1.msra.mxu0 %v1397
      %1573 = vmatprep.subr.mxu0 0.0
      %1574 = vmatpush1.msra.mxu0 %v1398
      %1575 = vmatprep.subr.mxu0 0.0
      %1576 = vmatpush1.msra.mxu0 %v1399
      %1577 = vmatprep.subr.mxu0 0.0
      %1578 = vmatpush1.msra.mxu0 %v1400
      %1579 = vmatprep.subr.mxu0 0.0
      %1580 = vmatpush1.msra.mxu0 %v1401
      %1581 = vmatprep.subr.mxu0 0.0
      %1582 = vmatpush1.msra.mxu0 %v1402
      %1583 = vmatprep.subr.mxu0 0.0
      %1584 = vmatpush1.msra.mxu0 %v1403
      %1585 = vmatprep.subr.mxu0 0.0
      %1586 = vmatpush1.msra.mxu0 %v1404
      %1587 = vmatprep.subr.mxu0 0.0
      %1588 = vmatpush1.msra.mxu0 %v1405
      %1589 = vmatprep.subr.mxu0 0.0
      %1590 = vmatpush1.msra.mxu0 %v1406
      %1591 = vmatprep.subr.mxu0 0.0
      %1592 = vmatpush1.msra.mxu0 %v1407
      %1593 = vmatprep.subr.mxu0 0.0
      %1594 = vmatpush1.msra.mxu0 %v1408
      %1595 = vmatprep.subr.mxu0 0.0
      %1596 = vmatpush1.msra.mxu0 %v1409
      %1597 = vmatprep.subr.mxu0 0.0
      %1598 = vmatpush1.msra.mxu0 %v1410
      %1599 = vmatprep.subr.mxu0 0.0
      %1600 = vmatpush1.msra.mxu0 %v1411
      %1601 = vmatprep.subr.mxu0 0.0
      %1602 = vmatpush1.msra.mxu0 %v1412
      %1603 = vmatprep.subr.mxu0 0.0
      %1604 = vmatpush1.msra.mxu0 %v1413
      %1605 = vmatprep.subr.mxu0 0.0
      %1606 = vmatpush1.msra.mxu0 %v1414
      %1607 = vmatprep.subr.mxu0 0.0
      %1608 = vmatpush1.msra.mxu0 %v1415
      %1609 = vmatprep.subr.mxu0 0.0
      %1610 = vmatpush1.msra.mxu0 %v1416
      %1611 = vmatprep.subr.mxu0 0.0
      %1612 = vmatpush1.msra.mxu0 %v1417
      %1613 = vmatprep.mubr.f32.mxu0 %v1448
      %1614 = vmatmul.mubr.f32.gmra.mrb[0].mxu0 %v1445
      %v1615 = vpop.f32.mrb[0].mxu0
      %v1616 = vadd.f32 %v1541, %v1615
      %v1617 = vpop.f32.mrb[0].mxu0
      %1618 = vmatprep.mubr.f32.mxu0 %v1459
      %1619 = vmatmul.mubr.f32.gmra.mrb[0].mxu0 %v1457
      %v1620 = vpop.f32.mrb[0].mxu0
      %v1621 = vadd.f32 %v1546, %v1620
      %v1622 = vpop.f32.mrb[0].mxu0
      %1623 = vdwg.mxu0
      %1624 = vmatprep.subr.mxu0 0.0
      %1625 = vmatpush1.msra.mxu0 %v1418
      %1626 = vmatprep.subr.mxu0 0.0
      %1627 = vmatpush1.msra.mxu0 %v1419
      %1628 = vmatprep.subr.mxu0 0.0
      %1629 = vmatpush1.msra.mxu0 %v1420
      %1630 = vmatprep.subr.mxu0 0.0
      %1631 = vmatpush1.msra.mxu0 %v1421
      %1632 = vmatprep.subr.mxu0 0.0
      %1633 = vmatpush1.msra.mxu0 %v1422
      %1634 = vmatprep.subr.mxu0 0.0
      %1635 = vmatpush1.msra.mxu0 %v1423
      %1636 = vmatprep.subr.mxu0 0.0
      %1637 = vmatpush1.msra.mxu0 %v1424
      %1638 = vmatprep.subr.mxu0 0.0
      %1639 = vmatpush1.msra.mxu0 %v1425
      %1640 = vmatprep.subr.mxu0 0.0
      %1641 = vmatpush1.msra.mxu0 0.0
      %1642 = vmatprep.subr.mxu0 0.0
      %1643 = vmatpush1.msra.mxu0 0.0
      %1644 = vmatprep.subr.mxu0 0.0
      %1645 = vmatpush1.msra.mxu0 0.0
      %1646 = vmatprep.subr.mxu0 0.0
      %1647 = vmatpush1.msra.mxu0 0.0
      %1648 = vmatprep.subr.mxu0 0.0
      %1649 = vmatpush1.msra.mxu0 0.0
      %1650 = vmatprep.subr.mxu0 0.0
      %1651 = vmatpush1.msra.mxu0 0.0
      %1652 = vmatprep.subr.mxu0 0.0
      %1653 = vmatpush1.msra.mxu0 0.0
      %1654 = vmatprep.subr.mxu0 0.0
      %1655 = vmatpush1.msra.mxu0 0.0
      %1656 = vmatprep.subr.mxu0 0.0
      %1657 = vmatpush1.msra.mxu0 0.0
      %1658 = vmatprep.subr.mxu0 0.0
      %1659 = vmatpush1.msra.mxu0 0.0
      %1660 = vmatprep.subr.mxu0 0.0
      %1661 = vmatpush1.msra.mxu0 0.0
      %1662 = vmatprep.subr.mxu0 0.0
      %1663 = vmatpush1.msra.mxu0 0.0
      %1664 = vmatprep.subr.mxu0 0.0
      %1665 = vmatpush1.msra.mxu0 0.0
      %1666 = vmatprep.subr.mxu0 0.0
      %1667 = vmatpush1.msra.mxu0 0.0
      %1668 = vmatprep.subr.mxu0 0.0
      %1669 = vmatpush1.msra.mxu0 0.0
      %1670 = vmatprep.subr.mxu0 0.0
      %1671 = vmatpush1.msra.mxu0 0.0
      %1672 = vmatprep.subr.mxu0 0.0
      %1673 = vmatpush1.msra.mxu0 0.0
      %1674 = vmatprep.subr.mxu0 0.0
      %1675 = vmatpush1.msra.mxu0 0.0
      %1676 = vmatprep.subr.mxu0 0.0
      %1677 = vmatpush1.msra.mxu0 0.0
      %1678 = vmatprep.subr.mxu0 0.0
      %1679 = vmatpush1.msra.mxu0 0.0
      %1680 = vmatprep.subr.mxu0 0.0
      %1681 = vmatpush1.msra.mxu0 0.0
      %1682 = vmatprep.subr.mxu0 0.0
      %1683 = vmatpush1.msra.mxu0 0.0
      %1684 = vmatprep.subr.mxu0 0.0
      %1685 = vmatpush1.msra.mxu0 0.0
      %1686 = vmatprep.subr.mxu0 0.0
      %1687 = vmatpush1.msra.mxu0 0.0
      %1688 = vmatprep.mubr.f32.mxu0 0.0
      %1689 = vmatmul.mubr.f32.gmra.mrb[0].mxu0 %v1470
      %v1690 = vpop.f32.mrb[0].mxu0
      %v1691 = vadd.f32 %v1616, %v1690
      %v1692 = vpop.f32.mrb[0].mxu0
      %1693 = vmatprep.mubr.f32.mxu0 0.0
      %1694 = vmatmul.mubr.f32.gmra.mrb[0].mxu0 %v1472
      %v1695 = vpop.f32.mrb[0].mxu0
      %v1696 = vadd.f32 %v1621, %v1695
      %v1697 = vpop.f32.mrb[0].mxu0
      %1698 = vdwg.mxu0
      %v1699 = vadd.f32 %v1335, %v1691
      %v1700 = vadd.f32 %v1340, %v1696
      %1701 = vst [vmem:[%s278] sm:$0xff] %v1699
      %1702 = vst [vmem:[%s278 + $0x8] sm:$0xff] %v1700
      %p1703 = scmp.lt.s32.totalorder %s18, 1
      %s1704 = scalar_select %p1703, %s18, 1
      %s1705 = smul.addr %s1704, 2
      %s1706 = smul.addr %s1705, 8
      %s1707 = scalar_lea.vmem %s7, %s1706
      // Predicated region
      $region49: #{dense_layer_forward.1} parent=47 // pred_check
        %p1708 = pneg %p188
      $region50: #{dense_layer_forward.1} parent=47 // pred_check_branch
        %1710 = sbr.rel (%p1708) target = $region52
      $region51: #{dense_layer_forward.1} parent=47 // pred_region
        _
      $region52: #{dense_layer_forward.1} parent=47 // pred_fallthru
        _
    $region48: #{dense_layer_forward.1} parent=5 // pred_fallthru
      _
    %p1711 = scmp.le.s32.totalorder 2, %s13
    // Predicated region
    $region53: #{dense_layer_forward.1} parent=5 // pred_check
      %p1712 = pneg %p1711
    $region54: #{dense_layer_forward.1} parent=5 // pred_check_branch
      %1714 = sbr.rel (%p1712) target = $region56
    $region55: #{dense_layer_forward.1} parent=5 // pred_region
      %s1715 = ssub.s32 %s13, 2
      // Predicated region
      $region57: #{dense_layer_forward.1} parent=55 // pred_check
        %p1716 = pneg %p194
      $region58: #{dense_layer_forward.1} parent=55 // pred_check_branch
        %1718 = sbr.rel (%p1716) target = $region60
      $region59: #{dense_layer_forward.1} parent=55 // pred_region
        %p1719 = scmp.lt.s32.totalorder %s19, 1
        %s1720 = scalar_select %p1719, %s19, 1
        %s1721 = smul.addr %s1720, 2
        %s1722 = smul.addr %s1721, 8
        %s1723 = scalar_lea.vmem %s7, %s1722
      $region60: #{dense_layer_forward.1} parent=55 // pred_fallthru
        _
    $region56: #{dense_layer_forward.1} parent=5 // pred_fallthru
      _
  $region6: #{dense_layer_forward.1} parent=0 // loop_footer
    %s17 = sadd.s32 1, %s13
  $region7: #{dense_layer_forward.1} parent=0 // loop_footer_branch
    %12 = sbr.rel target = $region3
  $region8: #{dense_layer_forward.1} parent=0 // loop_exit
    _

</llo_original>
